<compile_context>
chip_gen: v6e
topology: v6e:2x2x1
jax: 0.10.0
libtpu: 0.0.40
codegen_flags: <defaults>
</compile_context>

<pallas_src>
import functools

import jax
import jax.numpy as jnp
from jax.experimental import pallas as pl
from jax.experimental.pallas import tpu as pltpu


# ----------------------------------------------------------------------------
# Kernel
# ----------------------------------------------------------------------------
def _make_lstm_kernel(num_layers: int, seq_len: int, hidden_size: int,
                      matmul_dtype):
    """Build a Pallas kernel closed over static sizes.

    Ref order: x_tmajor, (w_ih_l, w_hh_l, b_l) * num_layers, w_fc, b_fc,
               out, hseq_scratch

    x_tmajor block is (1, T*Bb, in0) with rows ordered (t, b) within the block.
    Gate weights are pre-transposed to (in_features, 4H); gate order is
    PyTorch's (i, f, g, o); bias is b_ih + b_hh.
    """
    H = hidden_size
    T = seq_len

    def kernel(*refs):
        x_ref = refs[0]
        layer_refs = refs[1:1 + 3 * num_layers]
        w_fc_ref, b_fc_ref, out_ref, hseq_ref = refs[1 + 3 * num_layers:]

        TB = x_ref.shape[1]          # T * Bb
        Bb = TB // T                 # per-program batch block

        # Lane mask selecting the g-gate block [2H, 3H) of a (Bb, 4H) tile.
        lane = jax.lax.broadcasted_iota(jnp.int32, (Bb, 4 * H), 1)
        g_mask = (lane >= 2 * H) & (lane < 3 * H)

        layer_in = x_ref[0]          # (T*Bb, in0), float32

        h = None
        for l in range(num_layers):
            # Hoisted per-layer weight / bias loads (once per layer, not per t).
            w_ih = layer_refs[3 * l][...]        # (in_l, 4H)  matmul dtype
            w_hh = layer_refs[3 * l + 1][...]    # (H,   4H)   matmul dtype
            b = layer_refs[3 * l + 2][...]       # (1,   4H)   f32 (b_ih + b_hh)

            # Batched input-to-hidden GEMM over all timesteps -- off the
            # serial recurrence chain.  Bias added once.
            gx = jnp.dot(layer_in.astype(matmul_dtype), w_ih,
                         preferred_element_type=jnp.float32) + b   # (T*Bb, 4H)

            h = jnp.zeros((Bb, H), jnp.float32)
            c = jnp.zeros((Bb, H), jnp.float32)

            # Static unroll: T * num_layers cells is small (<= 16 here).
            for t in range(T):
                gates = gx[t * Bb:(t + 1) * Bb, :] + jnp.dot(
                    h.astype(matmul_dtype), w_hh,
                    preferred_element_type=jnp.float32)            # (Bb, 4H)

                # Full-tile activations (EUP) + lane select: [i | f | g | o].
                act = jnp.where(g_mask, jnp.tanh(gates),
                                jax.nn.sigmoid(gates))

                i_g = act[:, 0 * H:1 * H]
                f_g = act[:, 1 * H:2 * H]
                g_g = act[:, 2 * H:3 * H]
                o_g = act[:, 3 * H:4 * H]

                c = f_g * c + i_g * g_g
                h = o_g * jnp.tanh(c)

                if l < num_layers - 1:
                    hseq_ref[t * Bb:(t + 1) * Bb, :] = h

            if l < num_layers - 1:
                layer_in = hseq_ref[...]          # (T*Bb, H) next layer input

        # fc on the last timestep's hidden state of the top layer.
        logits = jnp.dot(h.astype(matmul_dtype), w_fc_ref[...],
                         preferred_element_type=jnp.float32) + b_fc_ref[...]
        out_ref[...] = logits.astype(out_ref.dtype)

    return kernel


# ----------------------------------------------------------------------------
# Wrapper
# ----------------------------------------------------------------------------
def _default_batch_blocks(batch: int) -> int:
    """Split the batch across TensorCores only on 2-TC chips (v7x) and only
    when the per-block batch keeps output blocks sublane-aligned (mult. of 8).
    On 1-TC chips a batch grid would just serialize the recurrence."""
    try:
        kind = jax.devices()[0].device_kind.lower()
    except Exception:
        return 1
    n_tc = 2 if "v7" in kind else 1
    if n_tc > 1 and batch % n_tc == 0 and (batch // n_tc) % 8 == 0:
        return n_tc
    return 1


def lstm_model_forward(x, params, *, hidden_size, num_layers, num_classes,
                       matmul_dtype=jnp.float32, batch_blocks=None):
    B, T, I = x.shape

    if batch_blocks is None:
        batch_blocks = _default_batch_blocks(B)
    if B % batch_blocks != 0 or (batch_blocks > 1
                                 and (B // batch_blocks) % 8 != 0):
        batch_blocks = 1
    nb = batch_blocks
    bb = B // nb

    # Wrapper-side layout plumbing (plain JAX, free): time-major within each
    # batch block -> every in-kernel tensor is 2-D, no in-kernel reshapes.
    # x[blk*bb + j, t, :] -> xt[blk, t*bb + j, :]
    xt = x.reshape(nb, bb, T, I).transpose(0, 2, 1, 3).reshape(nb, T * bb, I)

    kernel = _make_lstm_kernel(num_layers, T, hidden_size, matmul_dtype)

    def _maybe_cast(name, arr):
        # Only weights feeding jnp.dot get the (optional) bf16 cast; biases
        # and all elementwise gate math stay float32 (v5e-friendly).
        if matmul_dtype != jnp.float32 and name.startswith("w_"):
            return arr.astype(matmul_dtype)
        return arr

    names = []
    for l in range(num_layers):
        names += [f"w_ih_{l}", f"w_hh_{l}", f"b_{l}"]
    names += ["w_fc", "b_fc"]

    flat_args = [xt]
    in_specs = [pl.BlockSpec((1, T * bb, I), lambda i: (i, 0, 0))]
    for name in names:
        arr = _maybe_cast(name, params[name])
        flat_args.append(arr)
        in_specs.append(pl.BlockSpec(arr.shape, lambda i: (0, 0)))

    grid_spec = pltpu.PrefetchScalarGridSpec(
        num_scalar_prefetch=0,
        grid=(nb,),
        in_specs=in_specs,
        out_specs=pl.BlockSpec((bb, num_classes), lambda i: (i, 0)),
        scratch_shapes=[pltpu.VMEM((T * bb, hidden_size), jnp.float32)],
    )

    return pl.pallas_call(
        kernel,
        out_shape=jax.ShapeDtypeStruct((B, num_classes), jnp.float32),
        grid_spec=grid_spec,
        compiler_params=pltpu.CompilerParams(
            dimension_semantics=("parallel",),
            vmem_limit_bytes=32 * 1024 * 1024,
        ),
    )(*flat_args)


# ----------------------------------------------------------------------------
# Deterministic parameter init (same shapes/distribution as PyTorch defaults)
# ----------------------------------------------------------------------------
def init_params(key, input_size, hidden_size, num_layers, num_classes):
    params = {}
    k_lstm = 1.0 / jnp.sqrt(hidden_size)
    for l in range(num_layers):
        in_sz = input_size if l == 0 else hidden_size
        key, k1, k2, k3, k4 = jax.random.split(key, 5)
        # PyTorch stores (4H, in); we pre-transpose to (in, 4H) for the kernel.
        w_ih = jax.random.uniform(k1, (4 * hidden_size, in_sz), jnp.float32,
                                  -k_lstm, k_lstm).T
        w_hh = jax.random.uniform(k2, (4 * hidden_size, hidden_size),
                                  jnp.float32, -k_lstm, k_lstm).T
        b_ih = jax.random.uniform(k3, (4 * hidden_size,), jnp.float32,
                                  -k_lstm, k_lstm)
        b_hh = jax.random.uniform(k4, (4 * hidden_size,), jnp.float32,
                                  -k_lstm, k_lstm)
        params[f"w_ih_{l}"] = jnp.asarray(w_ih)
        params[f"w_hh_{l}"] = jnp.asarray(w_hh)
        params[f"b_{l}"] = (b_ih + b_hh).reshape(1, 4 * hidden_size)

    key, k5, k6 = jax.random.split(key, 3)
    k_fc = 1.0 / jnp.sqrt(hidden_size)
    w_fc = jax.random.uniform(k5, (num_classes, hidden_size), jnp.float32,
                              -k_fc, k_fc).T  # (H, C)
    b_fc = jax.random.uniform(k6, (num_classes,), jnp.float32, -k_fc, k_fc)
    params["w_fc"] = jnp.asarray(w_fc)
    params["b_fc"] = b_fc.reshape(1, num_classes)
    return params


# ----------------------------------------------------------------------------
# Pure-JAX reference (mirrors PyTorch LSTM inference semantics)
# ----------------------------------------------------------------------------
def reference_forward(x, params, *, hidden_size, num_layers):
    B, T, _ = x.shape
    H = hidden_size
    h = [jnp.zeros((B, H), jnp.float32) for _ in range(num_layers)]
    c = [jnp.zeros((B, H), jnp.float32) for _ in range(num_layers)]
    for t in range(T):
        inp = x[:, t, :]
        for l in range(num_layers):
            gates = (inp @ params[f"w_ih_{l}"] + h[l] @ params[f"w_hh_{l}"]
                     + params[f"b_{l}"])
            i_g = jax.nn.sigmoid(gates[:, 0 * H:1 * H])
            f_g = jax.nn.sigmoid(gates[:, 1 * H:2 * H])
            g_g = jnp.tanh(gates[:, 2 * H:3 * H])
            o_g = jax.nn.sigmoid(gates[:, 3 * H:4 * H])
            c[l] = f_g * c[l] + i_g * g_g
            h[l] = o_g * jnp.tanh(c[l])
            inp = h[l]
    return h[-1] @ params["w_fc"] + params["b_fc"]


# ----------------------------------------------------------------------------
if __name__ == "__main__":
    BATCH = 2
    SEQ = 8
    INPUT_SIZE = 16
    HIDDEN = 32
    NUM_LAYERS = 2
    NUM_CLASSES = 4

    key = jax.random.PRNGKey(0)
    key, xk = jax.random.split(key)
    x = jax.random.normal(xk, (BATCH, SEQ, INPUT_SIZE), dtype=jnp.float32)
    params = init_params(key, INPUT_SIZE, HIDDEN, NUM_LAYERS, NUM_CLASSES)

    fwd = functools.partial(
        lstm_model_forward,
        hidden_size=HIDDEN,
        num_layers=NUM_LAYERS,
        num_classes=NUM_CLASSES,
    )

    ref = reference_forward(x, params, hidden_size=HIDDEN,
                            num_layers=NUM_LAYERS)

    # 1) float32 matmul path (exact PyTorch-equivalent semantics).
    out = jax.block_until_ready(fwd(x, params))
    assert out.shape == (BATCH, NUM_CLASSES)
    assert jnp.allclose(out, ref, rtol=1e-4, atol=1e-4), \
        "Pallas kernel (f32) mismatch vs reference"

    # 2) bf16-matmul / f32-accumulate path (v6e / v7x MXU-friendly).
    out_bf16 = jax.block_until_ready(fwd(x, params,
                                         matmul_dtype=jnp.bfloat16))
    assert out_bf16.shape == (BATCH, NUM_CLASSES)
    assert jnp.allclose(out_bf16, ref, rtol=5e-2, atol=5e-2), \
        "Pallas kernel (bf16 matmul) mismatch vs reference"

    # 3) batch-parallel grid path (uses v7x's 2nd TensorCore; correct on all
    #    chips), exercised with a sublane-aligned per-block batch.
    B2 = 16
    key, xk2 = jax.random.split(key)
    x2 = jax.random.normal(xk2, (B2, SEQ, INPUT_SIZE), dtype=jnp.float32)
    out2 = jax.block_until_ready(fwd(x2, params, batch_blocks=2))
    ref2 = reference_forward(x2, params, hidden_size=HIDDEN,
                             num_layers=NUM_LAYERS)
    assert out2.shape == (B2, NUM_CLASSES)
    assert jnp.allclose(out2, ref2, rtol=1e-4, atol=1e-4), \
        "Pallas kernel (batch grid) mismatch vs reference"

    print("KERNEL_OK")
</pallas_src>

<mosaic_0001>
module attributes {stable_mosaic.version = 11 : i64} {
  func.func @kernel(%arg0: i32, %arg1: memref<1x16x16xf32, #tpu.memory_space<vmem>>, %arg2: memref<16x128xf32, #tpu.memory_space<vmem>>, %arg3: memref<32x128xf32, #tpu.memory_space<vmem>>, %arg4: memref<1x128xf32, #tpu.memory_space<vmem>>, %arg5: memref<32x128xf32, #tpu.memory_space<vmem>>, %arg6: memref<32x128xf32, #tpu.memory_space<vmem>>, %arg7: memref<1x128xf32, #tpu.memory_space<vmem>>, %arg8: memref<32x4xf32, #tpu.memory_space<vmem>>, %arg9: memref<1x4xf32, #tpu.memory_space<vmem>>, %arg10: memref<2x4xf32, #tpu.memory_space<vmem>>, %arg11: memref<16x32xf32, #tpu.memory_space<vmem>>) attributes {dimension_semantics = [#tpu.dimension_semantics<parallel>], iteration_bounds = array<i64: 1>, scalar_prefetch = 0 : i64, scratch_operands = 1 : i64, tpu.core_type = #tpu.core_type<tc>, window_params = [{transform_indices = @transform_0, window_bounds = array<i64: 1, 16, 16>}, {pipeline_mode = #tpu.pipeline_mode<synchronous>, transform_indices = @transform_1, window_bounds = array<i64: 16, 128>}, {pipeline_mode = #tpu.pipeline_mode<synchronous>, transform_indices = @transform_2, window_bounds = array<i64: 32, 128>}, {pipeline_mode = #tpu.pipeline_mode<synchronous>, transform_indices = @transform_3, window_bounds = array<i64: 1, 128>}, {pipeline_mode = #tpu.pipeline_mode<synchronous>, transform_indices = @transform_4, window_bounds = array<i64: 32, 128>}, {pipeline_mode = #tpu.pipeline_mode<synchronous>, transform_indices = @transform_5, window_bounds = array<i64: 32, 128>}, {pipeline_mode = #tpu.pipeline_mode<synchronous>, transform_indices = @transform_6, window_bounds = array<i64: 1, 128>}, {pipeline_mode = #tpu.pipeline_mode<synchronous>, transform_indices = @transform_7, window_bounds = array<i64: 32, 4>}, {pipeline_mode = #tpu.pipeline_mode<synchronous>, transform_indices = @transform_8, window_bounds = array<i64: 1, 4>}, {transform_indices = @transform_9, window_bounds = array<i64: 2, 4>}]} {
    %0 = tpu.iota {dimensions = array<i32: 1>} : vector<2x128xi32>
    %c64_i32 = arith.constant 64 : i32
    %1 = vector.broadcast %c64_i32 : i32 to vector<2x128xi32>
    %2 = arith.cmpi sge, %0, %1 : vector<2x128xi32>
    %c96_i32 = arith.constant 96 : i32
    %3 = vector.broadcast %c96_i32 : i32 to vector<2x128xi32>
    %4 = arith.cmpi slt, %0, %3 : vector<2x128xi32>
    %5 = arith.andi %2, %4 : vector<2x128xi1>
    %c0 = arith.constant 0 : index
    %c0_0 = arith.constant 0 : index
    %c0_1 = arith.constant 0 : index
    %6 = vector.load %arg1[%c0, %c0_0, %c0_1] : memref<1x16x16xf32, #tpu.memory_space<vmem>>, vector<1x16x16xf32>
    %7 = vector.shape_cast %6 : vector<1x16x16xf32> to vector<16x16xf32>
    %c0_2 = arith.constant 0 : index
    %c0_3 = arith.constant 0 : index
    %8 = vector.load %arg2[%c0_2, %c0_3] : memref<16x128xf32, #tpu.memory_space<vmem>>, vector<16x128xf32>
    %c0_4 = arith.constant 0 : index
    %c0_5 = arith.constant 0 : index
    %9 = vector.load %arg3[%c0_4, %c0_5] : memref<32x128xf32, #tpu.memory_space<vmem>>, vector<32x128xf32>
    %c0_6 = arith.constant 0 : index
    %c0_7 = arith.constant 0 : index
    %10 = vector.load %arg4[%c0_6, %c0_7] : memref<1x128xf32, #tpu.memory_space<vmem>>, vector<1x128xf32>
    %cst = arith.constant dense<0.000000e+00> : vector<16x128xf32>
    %11 = tpu.matmul %7, %8, %cst {dimension_numbers = #tpu.dot_dimension_numbers<[1], [0], [0], [1], [0, 0, 1, 1], [], []>} : vector<16x16xf32>, vector<16x128xf32>, vector<16x128xf32> -> vector<16x128xf32>
    %12 = vector.broadcast %10 : vector<1x128xf32> to vector<16x128xf32>
    %13 = arith.addf %11, %12 : vector<16x128xf32>
    %cst_8 = arith.constant 0.000000e+00 : f32
    %14 = vector.broadcast %cst_8 : f32 to vector<2x32xf32>
    %cst_9 = arith.constant 0.000000e+00 : f32
    %15 = vector.broadcast %cst_9 : f32 to vector<2x32xf32>
    %16 = vector.extract_strided_slice %13 {offsets = [0, 0], sizes = [2, 128], strides = [1, 1]} : vector<16x128xf32> to vector<2x128xf32>
    %cst_10 = arith.constant dense<0.000000e+00> : vector<2x128xf32>
    %17 = tpu.matmul %14, %9, %cst_10 {dimension_numbers = #tpu.dot_dimension_numbers<[1], [0], [0], [1], [0, 0, 1, 1], [], []>} : vector<2x32xf32>, vector<32x128xf32>, vector<2x128xf32> -> vector<2x128xf32>
    %18 = arith.addf %16, %17 : vector<2x128xf32>
    %19 = math.tanh %18 : vector<2x128xf32>
    %20 = arith.negf %18 : vector<2x128xf32>
    %21 = math.exp %20 : vector<2x128xf32>
    %cst_11 = arith.constant 1.000000e+00 : f32
    %22 = vector.broadcast %cst_11 : f32 to vector<2x128xf32>
    %23 = arith.addf %22, %21 : vector<2x128xf32>
    %24 = arith.divf %22, %23 : vector<2x128xf32>
    %25 = arith.select %5, %19, %24 : vector<2x128xi1>, vector<2x128xf32>
    %26 = vector.extract_strided_slice %25 {offsets = [0, 0], sizes = [2, 32], strides = [1, 1]} : vector<2x128xf32> to vector<2x32xf32>
    %27 = vector.extract_strided_slice %25 {offsets = [0, 32], sizes = [2, 32], strides = [1, 1]} : vector<2x128xf32> to vector<2x32xf32>
    %28 = vector.extract_strided_slice %25 {offsets = [0, 64], sizes = [2, 32], strides = [1, 1]} : vector<2x128xf32> to vector<2x32xf32>
    %29 = vector.extract_strided_slice %25 {offsets = [0, 96], sizes = [2, 32], strides = [1, 1]} : vector<2x128xf32> to vector<2x32xf32>
    %30 = arith.mulf %27, %15 : vector<2x32xf32>
    %31 = arith.mulf %26, %28 : vector<2x32xf32>
    %32 = arith.addf %30, %31 : vector<2x32xf32>
    %33 = math.tanh %32 : vector<2x32xf32>
    %34 = arith.mulf %29, %33 : vector<2x32xf32>
    %c0_12 = arith.constant 0 : index
    %c0_13 = arith.constant 0 : index
    %35 = vector.load %arg11[%c0_12, %c0_13] : memref<16x32xf32, #tpu.memory_space<vmem>>, vector<2x32xf32>
    tpu.vector_store %arg11[%c0_12, %c0_13], %34 {strides = array<i32>} : memref<16x32xf32, #tpu.memory_space<vmem>>, vector<2x32xf32>,
    %36 = vector.extract_strided_slice %13 {offsets = [2, 0], sizes = [2, 128], strides = [1, 1]} : vector<16x128xf32> to vector<2x128xf32>
    %cst_14 = arith.constant dense<0.000000e+00> : vector<2x128xf32>
    %37 = tpu.matmul %34, %9, %cst_14 {dimension_numbers = #tpu.dot_dimension_numbers<[1], [0], [0], [1], [0, 0, 1, 1], [], []>} : vector<2x32xf32>, vector<32x128xf32>, vector<2x128xf32> -> vector<2x128xf32>
    %38 = arith.addf %36, %37 : vector<2x128xf32>
    %39 = math.tanh %38 : vector<2x128xf32>
    %40 = arith.negf %38 : vector<2x128xf32>
    %41 = math.exp %40 : vector<2x128xf32>
    %cst_15 = arith.constant 1.000000e+00 : f32
    %42 = vector.broadcast %cst_15 : f32 to vector<2x128xf32>
    %43 = arith.addf %42, %41 : vector<2x128xf32>
    %44 = arith.divf %42, %43 : vector<2x128xf32>
    %45 = arith.select %5, %39, %44 : vector<2x128xi1>, vector<2x128xf32>
    %46 = vector.extract_strided_slice %45 {offsets = [0, 0], sizes = [2, 32], strides = [1, 1]} : vector<2x128xf32> to vector<2x32xf32>
    %47 = vector.extract_strided_slice %45 {offsets = [0, 32], sizes = [2, 32], strides = [1, 1]} : vector<2x128xf32> to vector<2x32xf32>
    %48 = vector.extract_strided_slice %45 {offsets = [0, 64], sizes = [2, 32], strides = [1, 1]} : vector<2x128xf32> to vector<2x32xf32>
    %49 = vector.extract_strided_slice %45 {offsets = [0, 96], sizes = [2, 32], strides = [1, 1]} : vector<2x128xf32> to vector<2x32xf32>
    %50 = arith.mulf %47, %32 : vector<2x32xf32>
    %51 = arith.mulf %46, %48 : vector<2x32xf32>
    %52 = arith.addf %50, %51 : vector<2x32xf32>
    %53 = math.tanh %52 : vector<2x32xf32>
    %54 = arith.mulf %49, %53 : vector<2x32xf32>
    %c2 = arith.constant 2 : index
    %c0_16 = arith.constant 0 : index
    %55 = vector.load %arg11[%c2, %c0_16] : memref<16x32xf32, #tpu.memory_space<vmem>>, vector<2x32xf32>
    tpu.vector_store %arg11[%c2, %c0_16], %54 {strides = array<i32>} : memref<16x32xf32, #tpu.memory_space<vmem>>, vector<2x32xf32>,
    %56 = vector.extract_strided_slice %13 {offsets = [4, 0], sizes = [2, 128], strides = [1, 1]} : vector<16x128xf32> to vector<2x128xf32>
    %cst_17 = arith.constant dense<0.000000e+00> : vector<2x128xf32>
    %57 = tpu.matmul %54, %9, %cst_17 {dimension_numbers = #tpu.dot_dimension_numbers<[1], [0], [0], [1], [0, 0, 1, 1], [], []>} : vector<2x32xf32>, vector<32x128xf32>, vector<2x128xf32> -> vector<2x128xf32>
    %58 = arith.addf %56, %57 : vector<2x128xf32>
    %59 = math.tanh %58 : vector<2x128xf32>
    %60 = arith.negf %58 : vector<2x128xf32>
    %61 = math.exp %60 : vector<2x128xf32>
    %cst_18 = arith.constant 1.000000e+00 : f32
    %62 = vector.broadcast %cst_18 : f32 to vector<2x128xf32>
    %63 = arith.addf %62, %61 : vector<2x128xf32>
    %64 = arith.divf %62, %63 : vector<2x128xf32>
    %65 = arith.select %5, %59, %64 : vector<2x128xi1>, vector<2x128xf32>
    %66 = vector.extract_strided_slice %65 {offsets = [0, 0], sizes = [2, 32], strides = [1, 1]} : vector<2x128xf32> to vector<2x32xf32>
    %67 = vector.extract_strided_slice %65 {offsets = [0, 32], sizes = [2, 32], strides = [1, 1]} : vector<2x128xf32> to vector<2x32xf32>
    %68 = vector.extract_strided_slice %65 {offsets = [0, 64], sizes = [2, 32], strides = [1, 1]} : vector<2x128xf32> to vector<2x32xf32>
    %69 = vector.extract_strided_slice %65 {offsets = [0, 96], sizes = [2, 32], strides = [1, 1]} : vector<2x128xf32> to vector<2x32xf32>
    %70 = arith.mulf %67, %52 : vector<2x32xf32>
    %71 = arith.mulf %66, %68 : vector<2x32xf32>
    %72 = arith.addf %70, %71 : vector<2x32xf32>
    %73 = math.tanh %72 : vector<2x32xf32>
    %74 = arith.mulf %69, %73 : vector<2x32xf32>
    %c4 = arith.constant 4 : index
    %c0_19 = arith.constant 0 : index
    %75 = vector.load %arg11[%c4, %c0_19] : memref<16x32xf32, #tpu.memory_space<vmem>>, vector<2x32xf32>
    tpu.vector_store %arg11[%c4, %c0_19], %74 {strides = array<i32>} : memref<16x32xf32, #tpu.memory_space<vmem>>, vector<2x32xf32>,
    %76 = vector.extract_strided_slice %13 {offsets = [6, 0], sizes = [2, 128], strides = [1, 1]} : vector<16x128xf32> to vector<2x128xf32>
    %cst_20 = arith.constant dense<0.000000e+00> : vector<2x128xf32>
    %77 = tpu.matmul %74, %9, %cst_20 {dimension_numbers = #tpu.dot_dimension_numbers<[1], [0], [0], [1], [0, 0, 1, 1], [], []>} : vector<2x32xf32>, vector<32x128xf32>, vector<2x128xf32> -> vector<2x128xf32>
    %78 = arith.addf %76, %77 : vector<2x128xf32>
    %79 = math.tanh %78 : vector<2x128xf32>
    %80 = arith.negf %78 : vector<2x128xf32>
    %81 = math.exp %80 : vector<2x128xf32>
    %cst_21 = arith.constant 1.000000e+00 : f32
    %82 = vector.broadcast %cst_21 : f32 to vector<2x128xf32>
    %83 = arith.addf %82, %81 : vector<2x128xf32>
    %84 = arith.divf %82, %83 : vector<2x128xf32>
    %85 = arith.select %5, %79, %84 : vector<2x128xi1>, vector<2x128xf32>
    %86 = vector.extract_strided_slice %85 {offsets = [0, 0], sizes = [2, 32], strides = [1, 1]} : vector<2x128xf32> to vector<2x32xf32>
    %87 = vector.extract_strided_slice %85 {offsets = [0, 32], sizes = [2, 32], strides = [1, 1]} : vector<2x128xf32> to vector<2x32xf32>
    %88 = vector.extract_strided_slice %85 {offsets = [0, 64], sizes = [2, 32], strides = [1, 1]} : vector<2x128xf32> to vector<2x32xf32>
    %89 = vector.extract_strided_slice %85 {offsets = [0, 96], sizes = [2, 32], strides = [1, 1]} : vector<2x128xf32> to vector<2x32xf32>
    %90 = arith.mulf %87, %72 : vector<2x32xf32>
    %91 = arith.mulf %86, %88 : vector<2x32xf32>
    %92 = arith.addf %90, %91 : vector<2x32xf32>
    %93 = math.tanh %92 : vector<2x32xf32>
    %94 = arith.mulf %89, %93 : vector<2x32xf32>
    %c6 = arith.constant 6 : index
    %c0_22 = arith.constant 0 : index
    %95 = vector.load %arg11[%c6, %c0_22] : memref<16x32xf32, #tpu.memory_space<vmem>>, vector<2x32xf32>
    tpu.vector_store %arg11[%c6, %c0_22], %94 {strides = array<i32>} : memref<16x32xf32, #tpu.memory_space<vmem>>, vector<2x32xf32>,
    %96 = vector.extract_strided_slice %13 {offsets = [8, 0], sizes = [2, 128], strides = [1, 1]} : vector<16x128xf32> to vector<2x128xf32>
    %cst_23 = arith.constant dense<0.000000e+00> : vector<2x128xf32>
    %97 = tpu.matmul %94, %9, %cst_23 {dimension_numbers = #tpu.dot_dimension_numbers<[1], [0], [0], [1], [0, 0, 1, 1], [], []>} : vector<2x32xf32>, vector<32x128xf32>, vector<2x128xf32> -> vector<2x128xf32>
    %98 = arith.addf %96, %97 : vector<2x128xf32>
    %99 = math.tanh %98 : vector<2x128xf32>
    %100 = arith.negf %98 : vector<2x128xf32>
    %101 = math.exp %100 : vector<2x128xf32>
    %cst_24 = arith.constant 1.000000e+00 : f32
    %102 = vector.broadcast %cst_24 : f32 to vector<2x128xf32>
    %103 = arith.addf %102, %101 : vector<2x128xf32>
    %104 = arith.divf %102, %103 : vector<2x128xf32>
    %105 = arith.select %5, %99, %104 : vector<2x128xi1>, vector<2x128xf32>
    %106 = vector.extract_strided_slice %105 {offsets = [0, 0], sizes = [2, 32], strides = [1, 1]} : vector<2x128xf32> to vector<2x32xf32>
    %107 = vector.extract_strided_slice %105 {offsets = [0, 32], sizes = [2, 32], strides = [1, 1]} : vector<2x128xf32> to vector<2x32xf32>
    %108 = vector.extract_strided_slice %105 {offsets = [0, 64], sizes = [2, 32], strides = [1, 1]} : vector<2x128xf32> to vector<2x32xf32>
    %109 = vector.extract_strided_slice %105 {offsets = [0, 96], sizes = [2, 32], strides = [1, 1]} : vector<2x128xf32> to vector<2x32xf32>
    %110 = arith.mulf %107, %92 : vector<2x32xf32>
    %111 = arith.mulf %106, %108 : vector<2x32xf32>
    %112 = arith.addf %110, %111 : vector<2x32xf32>
    %113 = math.tanh %112 : vector<2x32xf32>
    %114 = arith.mulf %109, %113 : vector<2x32xf32>
    %c8 = arith.constant 8 : index
    %c0_25 = arith.constant 0 : index
    %115 = vector.load %arg11[%c8, %c0_25] : memref<16x32xf32, #tpu.memory_space<vmem>>, vector<2x32xf32>
    tpu.vector_store %arg11[%c8, %c0_25], %114 {strides = array<i32>} : memref<16x32xf32, #tpu.memory_space<vmem>>, vector<2x32xf32>,
    %116 = vector.extract_strided_slice %13 {offsets = [10, 0], sizes = [2, 128], strides = [1, 1]} : vector<16x128xf32> to vector<2x128xf32>
    %cst_26 = arith.constant dense<0.000000e+00> : vector<2x128xf32>
    %117 = tpu.matmul %114, %9, %cst_26 {dimension_numbers = #tpu.dot_dimension_numbers<[1], [0], [0], [1], [0, 0, 1, 1], [], []>} : vector<2x32xf32>, vector<32x128xf32>, vector<2x128xf32> -> vector<2x128xf32>
    %118 = arith.addf %116, %117 : vector<2x128xf32>
    %119 = math.tanh %118 : vector<2x128xf32>
    %120 = arith.negf %118 : vector<2x128xf32>
    %121 = math.exp %120 : vector<2x128xf32>
    %cst_27 = arith.constant 1.000000e+00 : f32
    %122 = vector.broadcast %cst_27 : f32 to vector<2x128xf32>
    %123 = arith.addf %122, %121 : vector<2x128xf32>
    %124 = arith.divf %122, %123 : vector<2x128xf32>
    %125 = arith.select %5, %119, %124 : vector<2x128xi1>, vector<2x128xf32>
    %126 = vector.extract_strided_slice %125 {offsets = [0, 0], sizes = [2, 32], strides = [1, 1]} : vector<2x128xf32> to vector<2x32xf32>
    %127 = vector.extract_strided_slice %125 {offsets = [0, 32], sizes = [2, 32], strides = [1, 1]} : vector<2x128xf32> to vector<2x32xf32>
    %128 = vector.extract_strided_slice %125 {offsets = [0, 64], sizes = [2, 32], strides = [1, 1]} : vector<2x128xf32> to vector<2x32xf32>
    %129 = vector.extract_strided_slice %125 {offsets = [0, 96], sizes = [2, 32], strides = [1, 1]} : vector<2x128xf32> to vector<2x32xf32>
    %130 = arith.mulf %127, %112 : vector<2x32xf32>
    %131 = arith.mulf %126, %128 : vector<2x32xf32>
    %132 = arith.addf %130, %131 : vector<2x32xf32>
    %133 = math.tanh %132 : vector<2x32xf32>
    %134 = arith.mulf %129, %133 : vector<2x32xf32>
    %c10 = arith.constant 10 : index
    %c0_28 = arith.constant 0 : index
    %135 = vector.load %arg11[%c10, %c0_28] : memref<16x32xf32, #tpu.memory_space<vmem>>, vector<2x32xf32>
    tpu.vector_store %arg11[%c10, %c0_28], %134 {strides = array<i32>} : memref<16x32xf32, #tpu.memory_space<vmem>>, vector<2x32xf32>,
    %136 = vector.extract_strided_slice %13 {offsets = [12, 0], sizes = [2, 128], strides = [1, 1]} : vector<16x128xf32> to vector<2x128xf32>
    %cst_29 = arith.constant dense<0.000000e+00> : vector<2x128xf32>
    %137 = tpu.matmul %134, %9, %cst_29 {dimension_numbers = #tpu.dot_dimension_numbers<[1], [0], [0], [1], [0, 0, 1, 1], [], []>} : vector<2x32xf32>, vector<32x128xf32>, vector<2x128xf32> -> vector<2x128xf32>
    %138 = arith.addf %136, %137 : vector<2x128xf32>
    %139 = math.tanh %138 : vector<2x128xf32>
    %140 = arith.negf %138 : vector<2x128xf32>
    %141 = math.exp %140 : vector<2x128xf32>
    %cst_30 = arith.constant 1.000000e+00 : f32
    %142 = vector.broadcast %cst_30 : f32 to vector<2x128xf32>
    %143 = arith.addf %142, %141 : vector<2x128xf32>
    %144 = arith.divf %142, %143 : vector<2x128xf32>
    %145 = arith.select %5, %139, %144 : vector<2x128xi1>, vector<2x128xf32>
    %146 = vector.extract_strided_slice %145 {offsets = [0, 0], sizes = [2, 32], strides = [1, 1]} : vector<2x128xf32> to vector<2x32xf32>
    %147 = vector.extract_strided_slice %145 {offsets = [0, 32], sizes = [2, 32], strides = [1, 1]} : vector<2x128xf32> to vector<2x32xf32>
    %148 = vector.extract_strided_slice %145 {offsets = [0, 64], sizes = [2, 32], strides = [1, 1]} : vector<2x128xf32> to vector<2x32xf32>
    %149 = vector.extract_strided_slice %145 {offsets = [0, 96], sizes = [2, 32], strides = [1, 1]} : vector<2x128xf32> to vector<2x32xf32>
    %150 = arith.mulf %147, %132 : vector<2x32xf32>
    %151 = arith.mulf %146, %148 : vector<2x32xf32>
    %152 = arith.addf %150, %151 : vector<2x32xf32>
    %153 = math.tanh %152 : vector<2x32xf32>
    %154 = arith.mulf %149, %153 : vector<2x32xf32>
    %c12 = arith.constant 12 : index
    %c0_31 = arith.constant 0 : index
    %155 = vector.load %arg11[%c12, %c0_31] : memref<16x32xf32, #tpu.memory_space<vmem>>, vector<2x32xf32>
    tpu.vector_store %arg11[%c12, %c0_31], %154 {strides = array<i32>} : memref<16x32xf32, #tpu.memory_space<vmem>>, vector<2x32xf32>,
    %156 = vector.extract_strided_slice %13 {offsets = [14, 0], sizes = [2, 128], strides = [1, 1]} : vector<16x128xf32> to vector<2x128xf32>
    %cst_32 = arith.constant dense<0.000000e+00> : vector<2x128xf32>
    %157 = tpu.matmul %154, %9, %cst_32 {dimension_numbers = #tpu.dot_dimension_numbers<[1], [0], [0], [1], [0, 0, 1, 1], [], []>} : vector<2x32xf32>, vector<32x128xf32>, vector<2x128xf32> -> vector<2x128xf32>
    %158 = arith.addf %156, %157 : vector<2x128xf32>
    %159 = math.tanh %158 : vector<2x128xf32>
    %160 = arith.negf %158 : vector<2x128xf32>
    %161 = math.exp %160 : vector<2x128xf32>
    %cst_33 = arith.constant 1.000000e+00 : f32
    %162 = vector.broadcast %cst_33 : f32 to vector<2x128xf32>
    %163 = arith.addf %162, %161 : vector<2x128xf32>
    %164 = arith.divf %162, %163 : vector<2x128xf32>
    %165 = arith.select %5, %159, %164 : vector<2x128xi1>, vector<2x128xf32>
    %166 = vector.extract_strided_slice %165 {offsets = [0, 0], sizes = [2, 32], strides = [1, 1]} : vector<2x128xf32> to vector<2x32xf32>
    %167 = vector.extract_strided_slice %165 {offsets = [0, 32], sizes = [2, 32], strides = [1, 1]} : vector<2x128xf32> to vector<2x32xf32>
    %168 = vector.extract_strided_slice %165 {offsets = [0, 64], sizes = [2, 32], strides = [1, 1]} : vector<2x128xf32> to vector<2x32xf32>
    %169 = vector.extract_strided_slice %165 {offsets = [0, 96], sizes = [2, 32], strides = [1, 1]} : vector<2x128xf32> to vector<2x32xf32>
    %170 = arith.mulf %167, %152 : vector<2x32xf32>
    %171 = arith.mulf %166, %168 : vector<2x32xf32>
    %172 = arith.addf %170, %171 : vector<2x32xf32>
    %173 = math.tanh %172 : vector<2x32xf32>
    %174 = arith.mulf %169, %173 : vector<2x32xf32>
    %c14 = arith.constant 14 : index
    %c0_34 = arith.constant 0 : index
    %175 = vector.load %arg11[%c14, %c0_34] : memref<16x32xf32, #tpu.memory_space<vmem>>, vector<2x32xf32>
    tpu.vector_store %arg11[%c14, %c0_34], %174 {strides = array<i32>} : memref<16x32xf32, #tpu.memory_space<vmem>>, vector<2x32xf32>,
    %c0_35 = arith.constant 0 : index
    %c0_36 = arith.constant 0 : index
    %176 = vector.load %arg11[%c0_35, %c0_36] : memref<16x32xf32, #tpu.memory_space<vmem>>, vector<16x32xf32>
    %c0_37 = arith.constant 0 : index
    %c0_38 = arith.constant 0 : index
    %177 = vector.load %arg5[%c0_37, %c0_38] : memref<32x128xf32, #tpu.memory_space<vmem>>, vector<32x128xf32>
    %c0_39 = arith.constant 0 : index
    %c0_40 = arith.constant 0 : index
    %178 = vector.load %arg6[%c0_39, %c0_40] : memref<32x128xf32, #tpu.memory_space<vmem>>, vector<32x128xf32>
    %c0_41 = arith.constant 0 : index
    %c0_42 = arith.constant 0 : index
    %179 = vector.load %arg7[%c0_41, %c0_42] : memref<1x128xf32, #tpu.memory_space<vmem>>, vector<1x128xf32>
    %cst_43 = arith.constant dense<0.000000e+00> : vector<16x128xf32>
    %180 = tpu.matmul %176, %177, %cst_43 {dimension_numbers = #tpu.dot_dimension_numbers<[1], [0], [0], [1], [0, 0, 1, 1], [], []>} : vector<16x32xf32>, vector<32x128xf32>, vector<16x128xf32> -> vector<16x128xf32>
    %181 = vector.broadcast %179 : vector<1x128xf32> to vector<16x128xf32>
    %182 = arith.addf %180, %181 : vector<16x128xf32>
    %cst_44 = arith.constant 0.000000e+00 : f32
    %183 = vector.broadcast %cst_44 : f32 to vector<2x32xf32>
    %cst_45 = arith.constant 0.000000e+00 : f32
    %184 = vector.broadcast %cst_45 : f32 to vector<2x32xf32>
    %185 = vector.extract_strided_slice %182 {offsets = [0, 0], sizes = [2, 128], strides = [1, 1]} : vector<16x128xf32> to vector<2x128xf32>
    %cst_46 = arith.constant dense<0.000000e+00> : vector<2x128xf32>
    %186 = tpu.matmul %183, %178, %cst_46 {dimension_numbers = #tpu.dot_dimension_numbers<[1], [0], [0], [1], [0, 0, 1, 1], [], []>} : vector<2x32xf32>, vector<32x128xf32>, vector<2x128xf32> -> vector<2x128xf32>
    %187 = arith.addf %185, %186 : vector<2x128xf32>
    %188 = math.tanh %187 : vector<2x128xf32>
    %189 = arith.negf %187 : vector<2x128xf32>
    %190 = math.exp %189 : vector<2x128xf32>
    %cst_47 = arith.constant 1.000000e+00 : f32
    %191 = vector.broadcast %cst_47 : f32 to vector<2x128xf32>
    %192 = arith.addf %191, %190 : vector<2x128xf32>
    %193 = arith.divf %191, %192 : vector<2x128xf32>
    %194 = arith.select %5, %188, %193 : vector<2x128xi1>, vector<2x128xf32>
    %195 = vector.extract_strided_slice %194 {offsets = [0, 0], sizes = [2, 32], strides = [1, 1]} : vector<2x128xf32> to vector<2x32xf32>
    %196 = vector.extract_strided_slice %194 {offsets = [0, 32], sizes = [2, 32], strides = [1, 1]} : vector<2x128xf32> to vector<2x32xf32>
    %197 = vector.extract_strided_slice %194 {offsets = [0, 64], sizes = [2, 32], strides = [1, 1]} : vector<2x128xf32> to vector<2x32xf32>
    %198 = vector.extract_strided_slice %194 {offsets = [0, 96], sizes = [2, 32], strides = [1, 1]} : vector<2x128xf32> to vector<2x32xf32>
    %199 = arith.mulf %196, %184 : vector<2x32xf32>
    %200 = arith.mulf %195, %197 : vector<2x32xf32>
    %201 = arith.addf %199, %200 : vector<2x32xf32>
    %202 = math.tanh %201 : vector<2x32xf32>
    %203 = arith.mulf %198, %202 : vector<2x32xf32>
    %204 = vector.extract_strided_slice %182 {offsets = [2, 0], sizes = [2, 128], strides = [1, 1]} : vector<16x128xf32> to vector<2x128xf32>
    %cst_48 = arith.constant dense<0.000000e+00> : vector<2x128xf32>
    %205 = tpu.matmul %203, %178, %cst_48 {dimension_numbers = #tpu.dot_dimension_numbers<[1], [0], [0], [1], [0, 0, 1, 1], [], []>} : vector<2x32xf32>, vector<32x128xf32>, vector<2x128xf32> -> vector<2x128xf32>
    %206 = arith.addf %204, %205 : vector<2x128xf32>
    %207 = math.tanh %206 : vector<2x128xf32>
    %208 = arith.negf %206 : vector<2x128xf32>
    %209 = math.exp %208 : vector<2x128xf32>
    %cst_49 = arith.constant 1.000000e+00 : f32
    %210 = vector.broadcast %cst_49 : f32 to vector<2x128xf32>
    %211 = arith.addf %210, %209 : vector<2x128xf32>
    %212 = arith.divf %210, %211 : vector<2x128xf32>
    %213 = arith.select %5, %207, %212 : vector<2x128xi1>, vector<2x128xf32>
    %214 = vector.extract_strided_slice %213 {offsets = [0, 0], sizes = [2, 32], strides = [1, 1]} : vector<2x128xf32> to vector<2x32xf32>
    %215 = vector.extract_strided_slice %213 {offsets = [0, 32], sizes = [2, 32], strides = [1, 1]} : vector<2x128xf32> to vector<2x32xf32>
    %216 = vector.extract_strided_slice %213 {offsets = [0, 64], sizes = [2, 32], strides = [1, 1]} : vector<2x128xf32> to vector<2x32xf32>
    %217 = vector.extract_strided_slice %213 {offsets = [0, 96], sizes = [2, 32], strides = [1, 1]} : vector<2x128xf32> to vector<2x32xf32>
    %218 = arith.mulf %215, %201 : vector<2x32xf32>
    %219 = arith.mulf %214, %216 : vector<2x32xf32>
    %220 = arith.addf %218, %219 : vector<2x32xf32>
    %221 = math.tanh %220 : vector<2x32xf32>
    %222 = arith.mulf %217, %221 : vector<2x32xf32>
    %223 = vector.extract_strided_slice %182 {offsets = [4, 0], sizes = [2, 128], strides = [1, 1]} : vector<16x128xf32> to vector<2x128xf32>
    %cst_50 = arith.constant dense<0.000000e+00> : vector<2x128xf32>
    %224 = tpu.matmul %222, %178, %cst_50 {dimension_numbers = #tpu.dot_dimension_numbers<[1], [0], [0], [1], [0, 0, 1, 1], [], []>} : vector<2x32xf32>, vector<32x128xf32>, vector<2x128xf32> -> vector<2x128xf32>
    %225 = arith.addf %223, %224 : vector<2x128xf32>
    %226 = math.tanh %225 : vector<2x128xf32>
    %227 = arith.negf %225 : vector<2x128xf32>
    %228 = math.exp %227 : vector<2x128xf32>
    %cst_51 = arith.constant 1.000000e+00 : f32
    %229 = vector.broadcast %cst_51 : f32 to vector<2x128xf32>
    %230 = arith.addf %229, %228 : vector<2x128xf32>
    %231 = arith.divf %229, %230 : vector<2x128xf32>
    %232 = arith.select %5, %226, %231 : vector<2x128xi1>, vector<2x128xf32>
    %233 = vector.extract_strided_slice %232 {offsets = [0, 0], sizes = [2, 32], strides = [1, 1]} : vector<2x128xf32> to vector<2x32xf32>
    %234 = vector.extract_strided_slice %232 {offsets = [0, 32], sizes = [2, 32], strides = [1, 1]} : vector<2x128xf32> to vector<2x32xf32>
    %235 = vector.extract_strided_slice %232 {offsets = [0, 64], sizes = [2, 32], strides = [1, 1]} : vector<2x128xf32> to vector<2x32xf32>
    %236 = vector.extract_strided_slice %232 {offsets = [0, 96], sizes = [2, 32], strides = [1, 1]} : vector<2x128xf32> to vector<2x32xf32>
    %237 = arith.mulf %234, %220 : vector<2x32xf32>
    %238 = arith.mulf %233, %235 : vector<2x32xf32>
    %239 = arith.addf %237, %238 : vector<2x32xf32>
    %240 = math.tanh %239 : vector<2x32xf32>
    %241 = arith.mulf %236, %240 : vector<2x32xf32>
    %242 = vector.extract_strided_slice %182 {offsets = [6, 0], sizes = [2, 128], strides = [1, 1]} : vector<16x128xf32> to vector<2x128xf32>
    %cst_52 = arith.constant dense<0.000000e+00> : vector<2x128xf32>
    %243 = tpu.matmul %241, %178, %cst_52 {dimension_numbers = #tpu.dot_dimension_numbers<[1], [0], [0], [1], [0, 0, 1, 1], [], []>} : vector<2x32xf32>, vector<32x128xf32>, vector<2x128xf32> -> vector<2x128xf32>
    %244 = arith.addf %242, %243 : vector<2x128xf32>
    %245 = math.tanh %244 : vector<2x128xf32>
    %246 = arith.negf %244 : vector<2x128xf32>
    %247 = math.exp %246 : vector<2x128xf32>
    %cst_53 = arith.constant 1.000000e+00 : f32
    %248 = vector.broadcast %cst_53 : f32 to vector<2x128xf32>
    %249 = arith.addf %248, %247 : vector<2x128xf32>
    %250 = arith.divf %248, %249 : vector<2x128xf32>
    %251 = arith.select %5, %245, %250 : vector<2x128xi1>, vector<2x128xf32>
    %252 = vector.extract_strided_slice %251 {offsets = [0, 0], sizes = [2, 32], strides = [1, 1]} : vector<2x128xf32> to vector<2x32xf32>
    %253 = vector.extract_strided_slice %251 {offsets = [0, 32], sizes = [2, 32], strides = [1, 1]} : vector<2x128xf32> to vector<2x32xf32>
    %254 = vector.extract_strided_slice %251 {offsets = [0, 64], sizes = [2, 32], strides = [1, 1]} : vector<2x128xf32> to vector<2x32xf32>
    %255 = vector.extract_strided_slice %251 {offsets = [0, 96], sizes = [2, 32], strides = [1, 1]} : vector<2x128xf32> to vector<2x32xf32>
    %256 = arith.mulf %253, %239 : vector<2x32xf32>
    %257 = arith.mulf %252, %254 : vector<2x32xf32>
    %258 = arith.addf %256, %257 : vector<2x32xf32>
    %259 = math.tanh %258 : vector<2x32xf32>
    %260 = arith.mulf %255, %259 : vector<2x32xf32>
    %261 = vector.extract_strided_slice %182 {offsets = [8, 0], sizes = [2, 128], strides = [1, 1]} : vector<16x128xf32> to vector<2x128xf32>
    %cst_54 = arith.constant dense<0.000000e+00> : vector<2x128xf32>
    %262 = tpu.matmul %260, %178, %cst_54 {dimension_numbers = #tpu.dot_dimension_numbers<[1], [0], [0], [1], [0, 0, 1, 1], [], []>} : vector<2x32xf32>, vector<32x128xf32>, vector<2x128xf32> -> vector<2x128xf32>
    %263 = arith.addf %261, %262 : vector<2x128xf32>
    %264 = math.tanh %263 : vector<2x128xf32>
    %265 = arith.negf %263 : vector<2x128xf32>
    %266 = math.exp %265 : vector<2x128xf32>
    %cst_55 = arith.constant 1.000000e+00 : f32
    %267 = vector.broadcast %cst_55 : f32 to vector<2x128xf32>
    %268 = arith.addf %267, %266 : vector<2x128xf32>
    %269 = arith.divf %267, %268 : vector<2x128xf32>
    %270 = arith.select %5, %264, %269 : vector<2x128xi1>, vector<2x128xf32>
    %271 = vector.extract_strided_slice %270 {offsets = [0, 0], sizes = [2, 32], strides = [1, 1]} : vector<2x128xf32> to vector<2x32xf32>
    %272 = vector.extract_strided_slice %270 {offsets = [0, 32], sizes = [2, 32], strides = [1, 1]} : vector<2x128xf32> to vector<2x32xf32>
    %273 = vector.extract_strided_slice %270 {offsets = [0, 64], sizes = [2, 32], strides = [1, 1]} : vector<2x128xf32> to vector<2x32xf32>
    %274 = vector.extract_strided_slice %270 {offsets = [0, 96], sizes = [2, 32], strides = [1, 1]} : vector<2x128xf32> to vector<2x32xf32>
    %275 = arith.mulf %272, %258 : vector<2x32xf32>
    %276 = arith.mulf %271, %273 : vector<2x32xf32>
    %277 = arith.addf %275, %276 : vector<2x32xf32>
    %278 = math.tanh %277 : vector<2x32xf32>
    %279 = arith.mulf %274, %278 : vector<2x32xf32>
    %280 = vector.extract_strided_slice %182 {offsets = [10, 0], sizes = [2, 128], strides = [1, 1]} : vector<16x128xf32> to vector<2x128xf32>
    %cst_56 = arith.constant dense<0.000000e+00> : vector<2x128xf32>
    %281 = tpu.matmul %279, %178, %cst_56 {dimension_numbers = #tpu.dot_dimension_numbers<[1], [0], [0], [1], [0, 0, 1, 1], [], []>} : vector<2x32xf32>, vector<32x128xf32>, vector<2x128xf32> -> vector<2x128xf32>
    %282 = arith.addf %280, %281 : vector<2x128xf32>
    %283 = math.tanh %282 : vector<2x128xf32>
    %284 = arith.negf %282 : vector<2x128xf32>
    %285 = math.exp %284 : vector<2x128xf32>
    %cst_57 = arith.constant 1.000000e+00 : f32
    %286 = vector.broadcast %cst_57 : f32 to vector<2x128xf32>
    %287 = arith.addf %286, %285 : vector<2x128xf32>
    %288 = arith.divf %286, %287 : vector<2x128xf32>
    %289 = arith.select %5, %283, %288 : vector<2x128xi1>, vector<2x128xf32>
    %290 = vector.extract_strided_slice %289 {offsets = [0, 0], sizes = [2, 32], strides = [1, 1]} : vector<2x128xf32> to vector<2x32xf32>
    %291 = vector.extract_strided_slice %289 {offsets = [0, 32], sizes = [2, 32], strides = [1, 1]} : vector<2x128xf32> to vector<2x32xf32>
    %292 = vector.extract_strided_slice %289 {offsets = [0, 64], sizes = [2, 32], strides = [1, 1]} : vector<2x128xf32> to vector<2x32xf32>
    %293 = vector.extract_strided_slice %289 {offsets = [0, 96], sizes = [2, 32], strides = [1, 1]} : vector<2x128xf32> to vector<2x32xf32>
    %294 = arith.mulf %291, %277 : vector<2x32xf32>
    %295 = arith.mulf %290, %292 : vector<2x32xf32>
    %296 = arith.addf %294, %295 : vector<2x32xf32>
    %297 = math.tanh %296 : vector<2x32xf32>
    %298 = arith.mulf %293, %297 : vector<2x32xf32>
    %299 = vector.extract_strided_slice %182 {offsets = [12, 0], sizes = [2, 128], strides = [1, 1]} : vector<16x128xf32> to vector<2x128xf32>
    %cst_58 = arith.constant dense<0.000000e+00> : vector<2x128xf32>
    %300 = tpu.matmul %298, %178, %cst_58 {dimension_numbers = #tpu.dot_dimension_numbers<[1], [0], [0], [1], [0, 0, 1, 1], [], []>} : vector<2x32xf32>, vector<32x128xf32>, vector<2x128xf32> -> vector<2x128xf32>
    %301 = arith.addf %299, %300 : vector<2x128xf32>
    %302 = math.tanh %301 : vector<2x128xf32>
    %303 = arith.negf %301 : vector<2x128xf32>
    %304 = math.exp %303 : vector<2x128xf32>
    %cst_59 = arith.constant 1.000000e+00 : f32
    %305 = vector.broadcast %cst_59 : f32 to vector<2x128xf32>
    %306 = arith.addf %305, %304 : vector<2x128xf32>
    %307 = arith.divf %305, %306 : vector<2x128xf32>
    %308 = arith.select %5, %302, %307 : vector<2x128xi1>, vector<2x128xf32>
    %309 = vector.extract_strided_slice %308 {offsets = [0, 0], sizes = [2, 32], strides = [1, 1]} : vector<2x128xf32> to vector<2x32xf32>
    %310 = vector.extract_strided_slice %308 {offsets = [0, 32], sizes = [2, 32], strides = [1, 1]} : vector<2x128xf32> to vector<2x32xf32>
    %311 = vector.extract_strided_slice %308 {offsets = [0, 64], sizes = [2, 32], strides = [1, 1]} : vector<2x128xf32> to vector<2x32xf32>
    %312 = vector.extract_strided_slice %308 {offsets = [0, 96], sizes = [2, 32], strides = [1, 1]} : vector<2x128xf32> to vector<2x32xf32>
    %313 = arith.mulf %310, %296 : vector<2x32xf32>
    %314 = arith.mulf %309, %311 : vector<2x32xf32>
    %315 = arith.addf %313, %314 : vector<2x32xf32>
    %316 = math.tanh %315 : vector<2x32xf32>
    %317 = arith.mulf %312, %316 : vector<2x32xf32>
    %318 = vector.extract_strided_slice %182 {offsets = [14, 0], sizes = [2, 128], strides = [1, 1]} : vector<16x128xf32> to vector<2x128xf32>
    %cst_60 = arith.constant dense<0.000000e+00> : vector<2x128xf32>
    %319 = tpu.matmul %317, %178, %cst_60 {dimension_numbers = #tpu.dot_dimension_numbers<[1], [0], [0], [1], [0, 0, 1, 1], [], []>} : vector<2x32xf32>, vector<32x128xf32>, vector<2x128xf32> -> vector<2x128xf32>
    %320 = arith.addf %318, %319 : vector<2x128xf32>
    %321 = math.tanh %320 : vector<2x128xf32>
    %322 = arith.negf %320 : vector<2x128xf32>
    %323 = math.exp %322 : vector<2x128xf32>
    %cst_61 = arith.constant 1.000000e+00 : f32
    %324 = vector.broadcast %cst_61 : f32 to vector<2x128xf32>
    %325 = arith.addf %324, %323 : vector<2x128xf32>
    %326 = arith.divf %324, %325 : vector<2x128xf32>
    %327 = arith.select %5, %321, %326 : vector<2x128xi1>, vector<2x128xf32>
    %328 = vector.extract_strided_slice %327 {offsets = [0, 0], sizes = [2, 32], strides = [1, 1]} : vector<2x128xf32> to vector<2x32xf32>
    %329 = vector.extract_strided_slice %327 {offsets = [0, 32], sizes = [2, 32], strides = [1, 1]} : vector<2x128xf32> to vector<2x32xf32>
    %330 = vector.extract_strided_slice %327 {offsets = [0, 64], sizes = [2, 32], strides = [1, 1]} : vector<2x128xf32> to vector<2x32xf32>
    %331 = vector.extract_strided_slice %327 {offsets = [0, 96], sizes = [2, 32], strides = [1, 1]} : vector<2x128xf32> to vector<2x32xf32>
    %332 = arith.mulf %329, %315 : vector<2x32xf32>
    %333 = arith.mulf %328, %330 : vector<2x32xf32>
    %334 = arith.addf %332, %333 : vector<2x32xf32>
    %335 = math.tanh %334 : vector<2x32xf32>
    %336 = arith.mulf %331, %335 : vector<2x32xf32>
    %c0_62 = arith.constant 0 : index
    %c0_63 = arith.constant 0 : index
    %337 = vector.load %arg8[%c0_62, %c0_63] : memref<32x4xf32, #tpu.memory_space<vmem>>, vector<32x4xf32>
    %cst_64 = arith.constant dense<0.000000e+00> : vector<2x4xf32>
    %338 = tpu.matmul %336, %337, %cst_64 {dimension_numbers = #tpu.dot_dimension_numbers<[1], [0], [0], [1], [0, 0, 1, 1], [], []>} : vector<2x32xf32>, vector<32x4xf32>, vector<2x4xf32> -> vector<2x4xf32>
    %c0_65 = arith.constant 0 : index
    %c0_66 = arith.constant 0 : index
    %339 = vector.load %arg9[%c0_65, %c0_66] : memref<1x4xf32, #tpu.memory_space<vmem>>, vector<1x4xf32>
    %340 = vector.broadcast %339 : vector<1x4xf32> to vector<2x4xf32>
    %341 = arith.addf %338, %340 : vector<2x4xf32>
    %c0_67 = arith.constant 0 : index
    %c0_68 = arith.constant 0 : index
    %342 = vector.load %arg10[%c0_67, %c0_68] : memref<2x4xf32, #tpu.memory_space<vmem>>, vector<2x4xf32>
    tpu.vector_store %arg10[%c0_67, %c0_68], %341 {strides = array<i32>} : memref<2x4xf32, #tpu.memory_space<vmem>>, vector<2x4xf32>,
    return
  }
  func.func @transform_0(%arg0: i32) -> (i32, i32, i32) {
    %c0_i32 = arith.constant 0 : i32
    %c0_i32_0 = arith.constant 0 : i32
    %c0_i32_1 = arith.constant 0 : i32
    return %arg0, %c0_i32, %c0_i32_0 : i32, i32, i32
  }
  func.func @transform_1(%arg0: i32) -> (i32, i32) {
    %c0_i32 = arith.constant 0 : i32
    %c0_i32_0 = arith.constant 0 : i32
    %c0_i32_1 = arith.constant 0 : i32
    return %c0_i32, %c0_i32_0 : i32, i32
  }
  func.func @transform_2(%arg0: i32) -> (i32, i32) {
    %c0_i32 = arith.constant 0 : i32
    %c0_i32_0 = arith.constant 0 : i32
    %c0_i32_1 = arith.constant 0 : i32
    return %c0_i32, %c0_i32_0 : i32, i32
  }
  func.func @transform_3(%arg0: i32) -> (i32, i32) {
    %c0_i32 = arith.constant 0 : i32
    %c0_i32_0 = arith.constant 0 : i32
    %c0_i32_1 = arith.constant 0 : i32
    return %c0_i32, %c0_i32_0 : i32, i32
  }
  func.func @transform_4(%arg0: i32) -> (i32, i32) {
    %c0_i32 = arith.constant 0 : i32
    %c0_i32_0 = arith.constant 0 : i32
    %c0_i32_1 = arith.constant 0 : i32
    return %c0_i32, %c0_i32_0 : i32, i32
  }
  func.func @transform_5(%arg0: i32) -> (i32, i32) {
    %c0_i32 = arith.constant 0 : i32
    %c0_i32_0 = arith.constant 0 : i32
    %c0_i32_1 = arith.constant 0 : i32
    return %c0_i32, %c0_i32_0 : i32, i32
  }
  func.func @transform_6(%arg0: i32) -> (i32, i32) {
    %c0_i32 = arith.constant 0 : i32
    %c0_i32_0 = arith.constant 0 : i32
    %c0_i32_1 = arith.constant 0 : i32
    return %c0_i32, %c0_i32_0 : i32, i32
  }
  func.func @transform_7(%arg0: i32) -> (i32, i32) {
    %c0_i32 = arith.constant 0 : i32
    %c0_i32_0 = arith.constant 0 : i32
    %c0_i32_1 = arith.constant 0 : i32
    return %c0_i32, %c0_i32_0 : i32, i32
  }
  func.func @transform_8(%arg0: i32) -> (i32, i32) {
    %c0_i32 = arith.constant 0 : i32
    %c0_i32_0 = arith.constant 0 : i32
    %c0_i32_1 = arith.constant 0 : i32
    return %c0_i32, %c0_i32_0 : i32, i32
  }
  func.func @transform_9(%arg0: i32) -> (i32, i32) {
    %c0_i32 = arith.constant 0 : i32
    %c0_i32_0 = arith.constant 0 : i32
    return %arg0, %c0_i32 : i32, i32
  }
}

</mosaic_0001>

<llo_original>
// kernel: tpu_custom_call.1
$region0: #{tpu_custom_call.1}
  #allocation0 [shape = 'u32[]', space=smem, size = 0x4, offset = 0x4, fixed_abs, tag = 'smem constant byte address 0x4 - core index']
  #allocation1 [shape = 'u32[144,128]{1,0:T(1,128)}', space=vmem, size = 0x12000, scoped, tag = 'internal scratch']
  #allocation2 [shape = 'f32[16,32]{1,0:T(8,128)}', space=vmem, size = 0x2000, scoped, tag = 'scratch operand']
  %s0 = inlined_call_operand.hbm [shape: f32[1,16,16], index: 0, kind: input, shape index: {}]
  %s1 = inlined_call_operand.hbm [shape: f32[16,128], index: 1, kind: input, shape index: {}]
  %s2 = inlined_call_operand.vmem [shape: f32[32,128], index: 2, kind: input, shape index: {}]
  %s3 = inlined_call_operand.vmem [shape: f32[1,128], index: 3, kind: input, shape index: {}]
  %s4 = inlined_call_operand.hbm [shape: f32[32,128], index: 4, kind: input, shape index: {}]
  %s5 = inlined_call_operand.hbm [shape: f32[32,128], index: 5, kind: input, shape index: {}]
  %s6 = inlined_call_operand.vmem [shape: f32[1,128], index: 6, kind: input, shape index: {}]
  %s7 = inlined_call_operand.vmem [shape: f32[32,4], index: 7, kind: input, shape index: {}]
  %s8 = inlined_call_operand.vmem [shape: f32[1,4], index: 8, kind: input, shape index: {}]
  %s9 = inlined_call_operand.hbm [shape: f32[2,4], index: 9, kind: output, shape index: {}]
  %s10 = sld [smem:[#allocation0]]
  $region62: #{tpu_custom_call.1} parent=0
    _
  %s12 = ssub.s32 1, %s10
  %s13 = scalar_select 0, %s12, %s10
  $region1: #{tpu_custom_call.1} parent=0
    #allocation3 [shape = 'u8[8192]{0}', space=vmem, size = 0x2000, scoped, tag = 'input window, operand 0, single buffered']
    #allocation4 [shape = 's32[1]{0}', space=sflag, size = 0x4, scoped, tag = 'scoped memory for tpu_custom_call.1']
    #allocation5 [shape = 's32[1]{0}', space=sflag, size = 0x4, scoped, tag = 'scoped memory for tpu_custom_call.1']
    #allocation6 [shape = 'u8[8192]{0}', space=vmem, size = 0x2000, scoped, tag = 'input window, operand 1, single buffered']
    #allocation7 [shape = 's32[1]{0}', space=sflag, size = 0x4, scoped, tag = 'scoped memory for tpu_custom_call.1']
    #allocation8 [shape = 'u8[16384]{0}', space=vmem, size = 0x4000, scoped, tag = 'input window, operand 4, single buffered']
    #allocation9 [shape = 'u8[16384]{0}', space=vmem, size = 0x4000, scoped, tag = 'input window, operand 5, single buffered']
    #allocation10 [shape = 's32[1]{0}', space=sflag, size = 0x4, scoped, tag = 'scoped memory for tpu_custom_call.1']
    #allocation11 [shape = 'u8[1024]{0}', space=vmem, size = 0x400, scoped, tag = 'output window, operand 0, single buffered']
    %14 = vsyncpa [#allocation4], 0
    %15 = vsyncpa [#allocation7], 0
    %16 = vsyncpa [#allocation10], 0
    %17 = vsyncpa [#allocation5], 0
    // Predicated region
    $region2: #{tpu_custom_call.1} parent=1 // pred_check
      _
    $region3: #{tpu_custom_call.1} parent=1 // pred_check_branch
      %19 = sbr.rel (0) target = $region5
    $region4: #{tpu_custom_call.1} parent=1 // pred_region
      %s21 = ssub.s32 256, 256
      %22 = vsyncadd [#allocation4], %s21
      %s23 = sshll.u32 [#allocation3], 4
      %s24 = int_to_ptr.vmem [resolvable:$true] %s23
      %29 = dma.hbm_to_vmem [thread:$0]  %s0, 256, %s24, [#allocation4], 128, 128, 8
    $region5: #{tpu_custom_call.1} parent=1 // pred_fallthru
      _
    // Predicated region
    $region6: #{tpu_custom_call.1} parent=1 // pred_check
      _
    $region7: #{tpu_custom_call.1} parent=1 // pred_check_branch
      %31 = sbr.rel (0) target = $region9
    $region8: #{tpu_custom_call.1} parent=1 // pred_region
      %s33 = ssub.s32 256, 256
      %34 = vsyncadd [#allocation7], %s33
      %s35 = sshll.u32 [#allocation6], 4
      %s36 = int_to_ptr.vmem [resolvable:$true] %s35
      %41 = dma.hbm_to_vmem [thread:$0]  %s1, 256, %s36, [#allocation7], 128, 128, 8
    $region9: #{tpu_custom_call.1} parent=1 // pred_fallthru
      _
    // Predicated region
    $region10: #{tpu_custom_call.1} parent=1 // pred_check
      _
    $region11: #{tpu_custom_call.1} parent=1 // pred_check_branch
      %43 = sbr.rel (0) target = $region13
    $region12: #{tpu_custom_call.1} parent=1 // pred_region
      _
    $region13: #{tpu_custom_call.1} parent=1 // pred_fallthru
      _
    // Predicated region
    $region14: #{tpu_custom_call.1} parent=1 // pred_check
      _
    $region15: #{tpu_custom_call.1} parent=1 // pred_check_branch
      %45 = sbr.rel (0) target = $region17
    $region16: #{tpu_custom_call.1} parent=1 // pred_region
      _
    $region17: #{tpu_custom_call.1} parent=1 // pred_fallthru
      _
    // Predicated region
    $region18: #{tpu_custom_call.1} parent=1 // pred_check
      _
    $region19: #{tpu_custom_call.1} parent=1 // pred_check_branch
      %47 = sbr.rel (0) target = $region21
    $region20: #{tpu_custom_call.1} parent=1 // pred_region
      %s49 = ssub.s32 512, 512
      %50 = vsyncadd [#allocation7], %s49
      %s51 = sshll.u32 [#allocation8], 4
      %s52 = int_to_ptr.vmem [resolvable:$true] %s51
      %57 = dma.hbm_to_vmem [thread:$0]  %s4, 512, %s52, [#allocation7], 128, 128, 8
    $region21: #{tpu_custom_call.1} parent=1 // pred_fallthru
      _
    // Predicated region
    $region22: #{tpu_custom_call.1} parent=1 // pred_check
      _
    $region23: #{tpu_custom_call.1} parent=1 // pred_check_branch
      %59 = sbr.rel (0) target = $region25
    $region24: #{tpu_custom_call.1} parent=1 // pred_region
      %s61 = ssub.s32 512, 512
      %62 = vsyncadd [#allocation10], %s61
      %s63 = sshll.u32 [#allocation9], 4
      %s64 = int_to_ptr.vmem [resolvable:$true] %s63
      %69 = dma.hbm_to_vmem [thread:$0]  %s5, 512, %s64, [#allocation10], 128, 128, 8
    $region25: #{tpu_custom_call.1} parent=1 // pred_fallthru
      _
    // Predicated region
    $region26: #{tpu_custom_call.1} parent=1 // pred_check
      _
    $region27: #{tpu_custom_call.1} parent=1 // pred_check_branch
      %71 = sbr.rel (0) target = $region29
    $region28: #{tpu_custom_call.1} parent=1 // pred_region
      _
    $region29: #{tpu_custom_call.1} parent=1 // pred_fallthru
      _
    // Predicated region
    $region30: #{tpu_custom_call.1} parent=1 // pred_check
      _
    $region31: #{tpu_custom_call.1} parent=1 // pred_check_branch
      %73 = sbr.rel (0) target = $region33
    $region32: #{tpu_custom_call.1} parent=1 // pred_region
      _
    $region33: #{tpu_custom_call.1} parent=1 // pred_fallthru
      _
    // Predicated region
    $region34: #{tpu_custom_call.1} parent=1 // pred_check
      _
    $region35: #{tpu_custom_call.1} parent=1 // pred_check_branch
      %75 = sbr.rel (0) target = $region37
    $region36: #{tpu_custom_call.1} parent=1 // pred_region
      _
    $region37: #{tpu_custom_call.1} parent=1 // pred_fallthru
      _
    // Predicated region
    $region38: #{tpu_custom_call.1} parent=1 // pred_check
      _
    $region39: #{tpu_custom_call.1} parent=1 // pred_check_branch
      %77 = sbr.rel (0) target = $region41
    $region40: #{tpu_custom_call.1} parent=1 // pred_region
      %78 = dma.done [#allocation4], 256
    $region41: #{tpu_custom_call.1} parent=1 // pred_fallthru
      _
    // Predicated region
    $region42: #{tpu_custom_call.1} parent=1 // pred_check
      _
    $region43: #{tpu_custom_call.1} parent=1 // pred_check_branch
      %80 = sbr.rel (0) target = $region45
    $region44: #{tpu_custom_call.1} parent=1 // pred_region
      %81 = dma.done [#allocation7], 256
    $region45: #{tpu_custom_call.1} parent=1 // pred_fallthru
      _
    // Predicated region
    $region46: #{tpu_custom_call.1} parent=1 // pred_check
      _
    $region47: #{tpu_custom_call.1} parent=1 // pred_check_branch
      %83 = sbr.rel (0) target = $region49
    $region48: #{tpu_custom_call.1} parent=1 // pred_region
      %84 = dma.done [#allocation7], 512
    $region49: #{tpu_custom_call.1} parent=1 // pred_fallthru
      _
    // Predicated region
    $region50: #{tpu_custom_call.1} parent=1 // pred_check
      _
    $region51: #{tpu_custom_call.1} parent=1 // pred_check_branch
      %86 = sbr.rel (0) target = $region53
    $region52: #{tpu_custom_call.1} parent=1 // pred_region
      %87 = dma.done [#allocation10], 512
    $region53: #{tpu_custom_call.1} parent=1 // pred_fallthru
      _
    %v88 = vlaneseq
    %v89 = vand.u32 %v88, 127
    %vm90 = vcmp.ge.s32.totalorder %v89, 64
    %vm91 = vcmp.lt.s32.totalorder %v89, 96
    %vm92 = vmand %vm90, %vm91
    %v93 = vld [vmem:[#allocation3] sm:$0xff]
    %v94 = vld [vmem:[#allocation3 + $0x8] sm:$0xff]
    %v95 = vld [vmem:[#allocation6] sm:$0xff]
    %v96 = vld [vmem:[#allocation6 + $0x8] sm:$0xff]
    %v97 = vld [vmem:[%s2] sm:$0xff]
    %v98 = vld [vmem:[%s2 + $0x8] sm:$0xff]
    %v99 = vld [vmem:[%s2 + $0x10] sm:$0xff]
    %v100 = vld [vmem:[%s2 + $0x18] sm:$0xff]
    %v101 = vld [vmem:[%s3] sm:$0x1]
    %v103 = vlaneseq
    %v104 = vshrl.u32 %v103, 7
    %v105 = vsub.s32 0, %v104
    %v106 = vrot.slane %v101, %v105
    %vm108 = vcmask 130048
    %v110 = vsel %vm108, %v93, 0
    %v113 = vsel %vm108, %v94, 0
    %115 = vmatprep.subr.mxu0 0.0
    %116 = vmatpush1.msra.mxu0 0.0
    %117 = vmatprep.subr.mxu0 0.0
    %118 = vmatpush1.msra.mxu0 0.0
    %119 = vmatprep.subr.mxu0 0.0
    %120 = vmatpush1.msra.mxu0 0.0
    %121 = vmatprep.subr.mxu0 0.0
    %122 = vmatpush1.msra.mxu0 0.0
    %123 = vmatprep.subr.mxu0 0.0
    %124 = vmatpush1.msra.mxu0 0.0
    %125 = vmatprep.subr.mxu0 0.0
    %126 = vmatpush1.msra.mxu0 0.0
    %127 = vmatprep.subr.mxu0 0.0
    %128 = vmatpush1.msra.mxu0 0.0
    %129 = vmatprep.subr.mxu0 0.0
    %130 = vmatpush1.msra.mxu0 0.0
    %131 = vmatprep.subr.mxu0 0.0
    %132 = vmatpush1.msra.mxu0 0.0
    %133 = vmatprep.subr.mxu0 0.0
    %134 = vmatpush1.msra.mxu0 0.0
    %135 = vmatprep.subr.mxu0 0.0
    %136 = vmatpush1.msra.mxu0 0.0
    %137 = vmatprep.subr.mxu0 0.0
    %138 = vmatpush1.msra.mxu0 0.0
    %139 = vmatprep.subr.mxu0 0.0
    %140 = vmatpush1.msra.mxu0 0.0
    %141 = vmatprep.subr.mxu0 0.0
    %142 = vmatpush1.msra.mxu0 0.0
    %143 = vmatprep.subr.mxu0 0.0
    %144 = vmatpush1.msra.mxu0 %v96
    %145 = vmatprep.subr.mxu0 0.0
    %146 = vmatpush1.msra.mxu0 %v95
    %147 = vmatprep.subr.mxu0 0.0
    %148 = vmatpush2.msra.mxu0 0.0
    %149 = vmatprep.subr.mxu0 0.0
    %150 = vmatpush2.msra.mxu0 0.0
    %151 = vmatprep.subr.mxu0 0.0
    %152 = vmatpush2.msra.mxu0 0.0
    %153 = vmatprep.subr.mxu0 0.0
    %154 = vmatpush2.msra.mxu0 0.0
    %155 = vmatprep.subr.mxu0 0.0
    %156 = vmatpush2.msra.mxu0 0.0
    %157 = vmatprep.subr.mxu0 0.0
    %158 = vmatpush2.msra.mxu0 0.0
    %159 = vmatprep.subr.mxu0 0.0
    %160 = vmatpush2.msra.mxu0 0.0
    %161 = vmatprep.subr.mxu0 0.0
    %162 = vmatpush2.msra.mxu0 0.0
    %163 = vmatprep.subr.mxu0 0.0
    %164 = vmatpush2.msra.mxu0 0.0
    %165 = vmatprep.subr.mxu0 0.0
    %166 = vmatpush2.msra.mxu0 0.0
    %167 = vmatprep.subr.mxu0 0.0
    %168 = vmatpush2.msra.mxu0 0.0
    %169 = vmatprep.subr.mxu0 0.0
    %170 = vmatpush2.msra.mxu0 0.0
    %171 = vmatprep.subr.mxu0 0.0
    %172 = vmatpush2.msra.mxu0 0.0
    %173 = vmatprep.subr.mxu0 0.0
    %174 = vmatpush2.msra.mxu0 0.0
    %175 = vmatprep.subr.mxu0 0.0
    %176 = vmatpush2.msra.mxu0 0.0
    %177 = vmatprep.subr.mxu0 0.0
    %178 = vmatpush2.msra.mxu0 0.0
    %179 = vmatprep.mubr.f32.mxu0 0.0
    %180 = vmatmul.mubr.f32.gmra.mxu0 %v110
    %v181 = vpop.f32.mrf.mxu0
    %v182 = vadd.f32 %v106, %v181
    %v183 = vpop.f32.mrf.mxu0
    %184 = vmatprep.mubr.f32.mxu0 0.0
    %185 = vmatmul.mubr.f32.gmra.mxu0 %v113
    %v186 = vpop.f32.mrf.mxu0
    %v187 = vadd.f32 %v106, %v186
    %v188 = vpop.f32.mrf.mxu0
    %189 = vdwg.mxu0
    %vm190 = vcmask 261120
    %v192 = vsel %vm190, 0.0, 0
    %194 = vmatprep.subr.mxu0 0.0
    %195 = vmatpush1.msra.mxu0 0.0
    %196 = vmatprep.subr.mxu0 0.0
    %197 = vmatpush1.msra.mxu0 0.0
    %198 = vmatprep.subr.mxu0 0.0
    %199 = vmatpush1.msra.mxu0 0.0
    %200 = vmatprep.subr.mxu0 0.0
    %201 = vmatpush1.msra.mxu0 0.0
    %202 = vmatprep.subr.mxu0 0.0
    %203 = vmatpush1.msra.mxu0 0.0
    %204 = vmatprep.subr.mxu0 0.0
    %205 = vmatpush1.msra.mxu0 0.0
    %206 = vmatprep.subr.mxu0 0.0
    %207 = vmatpush1.msra.mxu0 0.0
    %208 = vmatprep.subr.mxu0 0.0
    %209 = vmatpush1.msra.mxu0 0.0
    %210 = vmatprep.subr.mxu0 0.0
    %211 = vmatpush1.msra.mxu0 0.0
    %212 = vmatprep.subr.mxu0 0.0
    %213 = vmatpush1.msra.mxu0 0.0
    %214 = vmatprep.subr.mxu0 0.0
    %215 = vmatpush1.msra.mxu0 0.0
    %216 = vmatprep.subr.mxu0 0.0
    %217 = vmatpush1.msra.mxu0 0.0
    %218 = vmatprep.subr.mxu0 0.0
    %219 = vmatpush1.msra.mxu0 %v100
    %220 = vmatprep.subr.mxu0 0.0
    %221 = vmatpush1.msra.mxu0 %v99
    %222 = vmatprep.subr.mxu0 0.0
    %223 = vmatpush1.msra.mxu0 %v98
    %224 = vmatprep.subr.mxu0 0.0
    %225 = vmatpush1.msra.mxu0 %v97
    %226 = vmatprep.subr.mxu0 0.0
    %227 = vmatpush2.msra.mxu0 0.0
    %228 = vmatprep.subr.mxu0 0.0
    %229 = vmatpush2.msra.mxu0 0.0
    %230 = vmatprep.subr.mxu0 0.0
    %231 = vmatpush2.msra.mxu0 0.0
    %232 = vmatprep.subr.mxu0 0.0
    %233 = vmatpush2.msra.mxu0 0.0
    %234 = vmatprep.subr.mxu0 0.0
    %235 = vmatpush2.msra.mxu0 0.0
    %236 = vmatprep.subr.mxu0 0.0
    %237 = vmatpush2.msra.mxu0 0.0
    %238 = vmatprep.subr.mxu0 0.0
    %239 = vmatpush2.msra.mxu0 0.0
    %240 = vmatprep.subr.mxu0 0.0
    %241 = vmatpush2.msra.mxu0 0.0
    %242 = vmatprep.subr.mxu0 0.0
    %243 = vmatpush2.msra.mxu0 0.0
    %244 = vmatprep.subr.mxu0 0.0
    %245 = vmatpush2.msra.mxu0 0.0
    %246 = vmatprep.subr.mxu0 0.0
    %247 = vmatpush2.msra.mxu0 0.0
    %248 = vmatprep.subr.mxu0 0.0
    %249 = vmatpush2.msra.mxu0 0.0
    %250 = vmatprep.subr.mxu0 0.0
    %251 = vmatpush2.msra.mxu0 0.0
    %252 = vmatprep.subr.mxu0 0.0
    %253 = vmatpush2.msra.mxu0 0.0
    %254 = vmatprep.subr.mxu0 0.0
    %255 = vmatpush2.msra.mxu0 0.0
    %256 = vmatprep.subr.mxu0 0.0
    %257 = vmatpush2.msra.mxu0 0.0
    %258 = vmatprep.mubr.f32.mxu0 0.0
    %259 = vmatmul.mubr.f32.gmra.mxu0 %v192
    %v260 = vpop.f32.mrf.mxu0
    %v261 = vadd.f32 0.0, %v260
    %v262 = vpop.f32.mrf.mxu0
    %263 = vdwg.mxu0
    %v264 = vadd.f32 %v182, %v261
    %v265 = vtanh.pop %v264
    %v266 = vxor.u32 %v264, 2147483648
    %v267 = vmul.f32 %v266, 1.442695
    %v268 = vpow.pop %v267
    %v269 = vadd.f32 %v268, 1.0
    %v270 = vrcp.pop %v269
    %v271 = vmul.f32 1.0, %v270
    %v272 = vsel %vm92, %v265, %v271
    %v273 = vmul.f32 %v272, 0.0
    %275 = vrot.lane.b32.xlu0 %v272, 64
    %v276 = vpop.permute.xlu0 %275
    %v278 = vmul.f32 %v272, %v276
    %280 = vrot.lane.b32.xlu0 %v278, 32
    %v281 = vpop.permute.xlu0 %280
    %v283 = vadd.f32 %v273, %v281
    %v284 = vtanh.pop %v283
    %286 = vrot.lane.b32.xlu0 %v284, 64
    %v287 = vpop.permute.xlu0 %286
    %v289 = vmul.f32 %v272, %v287
    %291 = vrot.lane.b32.xlu0 %v289, 32
    %v292 = vpop.permute.xlu0 %291
    %vm294 = vcmask 254976
    %295 = vst.msk [vmem:[#allocation2] sm:$0x3] %vm294, %v292
    %v296 = vsel %vm190, %v292, 0
    %298 = vmatprep.subr.mxu0 0.0
    %299 = vmatpush1.msra.mxu0 0.0
    %300 = vmatprep.subr.mxu0 0.0
    %301 = vmatpush1.msra.mxu0 0.0
    %302 = vmatprep.subr.mxu0 0.0
    %303 = vmatpush1.msra.mxu0 0.0
    %304 = vmatprep.subr.mxu0 0.0
    %305 = vmatpush1.msra.mxu0 0.0
    %306 = vmatprep.subr.mxu0 0.0
    %307 = vmatpush1.msra.mxu0 0.0
    %308 = vmatprep.subr.mxu0 0.0
    %309 = vmatpush1.msra.mxu0 0.0
    %310 = vmatprep.subr.mxu0 0.0
    %311 = vmatpush1.msra.mxu0 0.0
    %312 = vmatprep.subr.mxu0 0.0
    %313 = vmatpush1.msra.mxu0 0.0
    %314 = vmatprep.subr.mxu0 0.0
    %315 = vmatpush1.msra.mxu0 0.0
    %316 = vmatprep.subr.mxu0 0.0
    %317 = vmatpush1.msra.mxu0 0.0
    %318 = vmatprep.subr.mxu0 0.0
    %319 = vmatpush1.msra.mxu0 0.0
    %320 = vmatprep.subr.mxu0 0.0
    %321 = vmatpush1.msra.mxu0 0.0
    %322 = vmatprep.subr.mxu0 0.0
    %323 = vmatpush1.msra.mxu0 %v100
    %324 = vmatprep.subr.mxu0 0.0
    %325 = vmatpush1.msra.mxu0 %v99
    %326 = vmatprep.subr.mxu0 0.0
    %327 = vmatpush1.msra.mxu0 %v98
    %328 = vmatprep.subr.mxu0 0.0
    %329 = vmatpush1.msra.mxu0 %v97
    %330 = vmatprep.subr.mxu0 0.0
    %331 = vmatpush2.msra.mxu0 0.0
    %332 = vmatprep.subr.mxu0 0.0
    %333 = vmatpush2.msra.mxu0 0.0
    %334 = vmatprep.subr.mxu0 0.0
    %335 = vmatpush2.msra.mxu0 0.0
    %336 = vmatprep.subr.mxu0 0.0
    %337 = vmatpush2.msra.mxu0 0.0
    %338 = vmatprep.subr.mxu0 0.0
    %339 = vmatpush2.msra.mxu0 0.0
    %340 = vmatprep.subr.mxu0 0.0
    %341 = vmatpush2.msra.mxu0 0.0
    %342 = vmatprep.subr.mxu0 0.0
    %343 = vmatpush2.msra.mxu0 0.0
    %344 = vmatprep.subr.mxu0 0.0
    %345 = vmatpush2.msra.mxu0 0.0
    %346 = vmatprep.subr.mxu0 0.0
    %347 = vmatpush2.msra.mxu0 0.0
    %348 = vmatprep.subr.mxu0 0.0
    %349 = vmatpush2.msra.mxu0 0.0
    %350 = vmatprep.subr.mxu0 0.0
    %351 = vmatpush2.msra.mxu0 0.0
    %352 = vmatprep.subr.mxu0 0.0
    %353 = vmatpush2.msra.mxu0 0.0
    %354 = vmatprep.subr.mxu0 0.0
    %355 = vmatpush2.msra.mxu0 0.0
    %356 = vmatprep.subr.mxu0 0.0
    %357 = vmatpush2.msra.mxu0 0.0
    %358 = vmatprep.subr.mxu0 0.0
    %359 = vmatpush2.msra.mxu0 0.0
    %360 = vmatprep.subr.mxu0 0.0
    %361 = vmatpush2.msra.mxu0 0.0
    %362 = vmatprep.mubr.f32.mxu0 0.0
    %363 = vmatmul.mubr.f32.gmra.mxu0 %v296
    %v364 = vpop.f32.mrf.mxu0
    %v365 = vadd.f32 0.0, %v364
    %v366 = vpop.f32.mrf.mxu0
    %367 = vdwg.mxu0
    %v369 = vrot.slane %v365, 6
    %v371 = vadd.f32 %v182, %v369
    %v372 = vtanh.pop %v371
    %v373 = vxor.u32 %v371, 2147483648
    %v374 = vmul.f32 %v373, 1.442695
    %v375 = vpow.pop %v374
    %v376 = vadd.f32 %v375, 1.0
    %v377 = vrcp.pop %v376
    %v378 = vmul.f32 1.0, %v377
    %v379 = vsel %vm92, %v372, %v378
    %v381 = vrot.slane %v283, 6
    %v383 = vmul.f32 %v379, %v381
    %385 = vrot.lane.b32.xlu0 %v379, 64
    %v386 = vpop.permute.xlu0 %385
    %v388 = vmul.f32 %v379, %v386
    %390 = vrot.lane.b32.xlu0 %v388, 32
    %v391 = vpop.permute.xlu0 %390
    %v393 = vadd.f32 %v383, %v391
    %v394 = vtanh.pop %v393
    %396 = vrot.lane.b32.xlu0 %v394, 64
    %v397 = vpop.permute.xlu0 %396
    %v399 = vmul.f32 %v379, %v397
    %401 = vrot.lane.b32.xlu0 %v399, 32
    %v402 = vpop.permute.xlu0 %401
    %vm404 = vcmask 257026
    %405 = vst.msk [vmem:[#allocation2] sm:$0xc] %vm404, %v402
    %v406 = vrot.slane %v399, 2
    %407 = vrot.lane.b32.xlu0 %v406, 32
    %v408 = vpop.permute.xlu0 %407
    %v409 = vsel %vm190, %v408, 0
    %411 = vmatprep.subr.mxu0 0.0
    %412 = vmatpush1.msra.mxu0 0.0
    %413 = vmatprep.subr.mxu0 0.0
    %414 = vmatpush1.msra.mxu0 0.0
    %415 = vmatprep.subr.mxu0 0.0
    %416 = vmatpush1.msra.mxu0 0.0
    %417 = vmatprep.subr.mxu0 0.0
    %418 = vmatpush1.msra.mxu0 0.0
    %419 = vmatprep.subr.mxu0 0.0
    %420 = vmatpush1.msra.mxu0 0.0
    %421 = vmatprep.subr.mxu0 0.0
    %422 = vmatpush1.msra.mxu0 0.0
    %423 = vmatprep.subr.mxu0 0.0
    %424 = vmatpush1.msra.mxu0 0.0
    %425 = vmatprep.subr.mxu0 0.0
    %426 = vmatpush1.msra.mxu0 0.0
    %427 = vmatprep.subr.mxu0 0.0
    %428 = vmatpush1.msra.mxu0 0.0
    %429 = vmatprep.subr.mxu0 0.0
    %430 = vmatpush1.msra.mxu0 0.0
    %431 = vmatprep.subr.mxu0 0.0
    %432 = vmatpush1.msra.mxu0 0.0
    %433 = vmatprep.subr.mxu0 0.0
    %434 = vmatpush1.msra.mxu0 0.0
    %435 = vmatprep.subr.mxu0 0.0
    %436 = vmatpush1.msra.mxu0 %v100
    %437 = vmatprep.subr.mxu0 0.0
    %438 = vmatpush1.msra.mxu0 %v99
    %439 = vmatprep.subr.mxu0 0.0
    %440 = vmatpush1.msra.mxu0 %v98
    %441 = vmatprep.subr.mxu0 0.0
    %442 = vmatpush1.msra.mxu0 %v97
    %443 = vmatprep.subr.mxu0 0.0
    %444 = vmatpush2.msra.mxu0 0.0
    %445 = vmatprep.subr.mxu0 0.0
    %446 = vmatpush2.msra.mxu0 0.0
    %447 = vmatprep.subr.mxu0 0.0
    %448 = vmatpush2.msra.mxu0 0.0
    %449 = vmatprep.subr.mxu0 0.0
    %450 = vmatpush2.msra.mxu0 0.0
    %451 = vmatprep.subr.mxu0 0.0
    %452 = vmatpush2.msra.mxu0 0.0
    %453 = vmatprep.subr.mxu0 0.0
    %454 = vmatpush2.msra.mxu0 0.0
    %455 = vmatprep.subr.mxu0 0.0
    %456 = vmatpush2.msra.mxu0 0.0
    %457 = vmatprep.subr.mxu0 0.0
    %458 = vmatpush2.msra.mxu0 0.0
    %459 = vmatprep.subr.mxu0 0.0
    %460 = vmatpush2.msra.mxu0 0.0
    %461 = vmatprep.subr.mxu0 0.0
    %462 = vmatpush2.msra.mxu0 0.0
    %463 = vmatprep.subr.mxu0 0.0
    %464 = vmatpush2.msra.mxu0 0.0
    %465 = vmatprep.subr.mxu0 0.0
    %466 = vmatpush2.msra.mxu0 0.0
    %467 = vmatprep.subr.mxu0 0.0
    %468 = vmatpush2.msra.mxu0 0.0
    %469 = vmatprep.subr.mxu0 0.0
    %470 = vmatpush2.msra.mxu0 0.0
    %471 = vmatprep.subr.mxu0 0.0
    %472 = vmatpush2.msra.mxu0 0.0
    %473 = vmatprep.subr.mxu0 0.0
    %474 = vmatpush2.msra.mxu0 0.0
    %475 = vmatprep.mubr.f32.mxu0 0.0
    %476 = vmatmul.mubr.f32.gmra.mxu0 %v409
    %v477 = vpop.f32.mrf.mxu0
    %v478 = vadd.f32 0.0, %v477
    %v479 = vpop.f32.mrf.mxu0
    %480 = vdwg.mxu0
    %v482 = vrot.slane %v478, 4
    %v484 = vadd.f32 %v182, %v482
    %v485 = vtanh.pop %v484
    %v486 = vxor.u32 %v484, 2147483648
    %v487 = vmul.f32 %v486, 1.442695
    %v488 = vpow.pop %v487
    %v489 = vadd.f32 %v488, 1.0
    %v490 = vrcp.pop %v489
    %v491 = vmul.f32 1.0, %v490
    %v492 = vsel %vm92, %v485, %v491
    %v494 = vrot.slane %v393, 6
    %v496 = vmul.f32 %v492, %v494
    %498 = vrot.lane.b32.xlu0 %v492, 64
    %v499 = vpop.permute.xlu0 %498
    %v501 = vmul.f32 %v492, %v499
    %503 = vrot.lane.b32.xlu0 %v501, 32
    %v504 = vpop.permute.xlu0 %503
    %v506 = vadd.f32 %v496, %v504
    %v507 = vtanh.pop %v506
    %509 = vrot.lane.b32.xlu0 %v507, 64
    %v510 = vpop.permute.xlu0 %509
    %v512 = vmul.f32 %v492, %v510
    %514 = vrot.lane.b32.xlu0 %v512, 32
    %v515 = vpop.permute.xlu0 %514
    %vm517 = vcmask 259076
    %518 = vst.msk [vmem:[#allocation2] sm:$0x30] %vm517, %v515
    %v519 = vrot.slane %v512, 4
    %520 = vrot.lane.b32.xlu0 %v519, 32
    %v521 = vpop.permute.xlu0 %520
    %v522 = vsel %vm190, %v521, 0
    %524 = vmatprep.subr.mxu0 0.0
    %525 = vmatpush1.msra.mxu0 0.0
    %526 = vmatprep.subr.mxu0 0.0
    %527 = vmatpush1.msra.mxu0 0.0
    %528 = vmatprep.subr.mxu0 0.0
    %529 = vmatpush1.msra.mxu0 0.0
    %530 = vmatprep.subr.mxu0 0.0
    %531 = vmatpush1.msra.mxu0 0.0
    %532 = vmatprep.subr.mxu0 0.0
    %533 = vmatpush1.msra.mxu0 0.0
    %534 = vmatprep.subr.mxu0 0.0
    %535 = vmatpush1.msra.mxu0 0.0
    %536 = vmatprep.subr.mxu0 0.0
    %537 = vmatpush1.msra.mxu0 0.0
    %538 = vmatprep.subr.mxu0 0.0
    %539 = vmatpush1.msra.mxu0 0.0
    %540 = vmatprep.subr.mxu0 0.0
    %541 = vmatpush1.msra.mxu0 0.0
    %542 = vmatprep.subr.mxu0 0.0
    %543 = vmatpush1.msra.mxu0 0.0
    %544 = vmatprep.subr.mxu0 0.0
    %545 = vmatpush1.msra.mxu0 0.0
    %546 = vmatprep.subr.mxu0 0.0
    %547 = vmatpush1.msra.mxu0 0.0
    %548 = vmatprep.subr.mxu0 0.0
    %549 = vmatpush1.msra.mxu0 %v100
    %550 = vmatprep.subr.mxu0 0.0
    %551 = vmatpush1.msra.mxu0 %v99
    %552 = vmatprep.subr.mxu0 0.0
    %553 = vmatpush1.msra.mxu0 %v98
    %554 = vmatprep.subr.mxu0 0.0
    %555 = vmatpush1.msra.mxu0 %v97
    %556 = vmatprep.subr.mxu0 0.0
    %557 = vmatpush2.msra.mxu0 0.0
    %558 = vmatprep.subr.mxu0 0.0
    %559 = vmatpush2.msra.mxu0 0.0
    %560 = vmatprep.subr.mxu0 0.0
    %561 = vmatpush2.msra.mxu0 0.0
    %562 = vmatprep.subr.mxu0 0.0
    %563 = vmatpush2.msra.mxu0 0.0
    %564 = vmatprep.subr.mxu0 0.0
    %565 = vmatpush2.msra.mxu0 0.0
    %566 = vmatprep.subr.mxu0 0.0
    %567 = vmatpush2.msra.mxu0 0.0
    %568 = vmatprep.subr.mxu0 0.0
    %569 = vmatpush2.msra.mxu0 0.0
    %570 = vmatprep.subr.mxu0 0.0
    %571 = vmatpush2.msra.mxu0 0.0
    %572 = vmatprep.subr.mxu0 0.0
    %573 = vmatpush2.msra.mxu0 0.0
    %574 = vmatprep.subr.mxu0 0.0
    %575 = vmatpush2.msra.mxu0 0.0
    %576 = vmatprep.subr.mxu0 0.0
    %577 = vmatpush2.msra.mxu0 0.0
    %578 = vmatprep.subr.mxu0 0.0
    %579 = vmatpush2.msra.mxu0 0.0
    %580 = vmatprep.subr.mxu0 0.0
    %581 = vmatpush2.msra.mxu0 0.0
    %582 = vmatprep.subr.mxu0 0.0
    %583 = vmatpush2.msra.mxu0 0.0
    %584 = vmatprep.subr.mxu0 0.0
    %585 = vmatpush2.msra.mxu0 0.0
    %586 = vmatprep.subr.mxu0 0.0
    %587 = vmatpush2.msra.mxu0 0.0
    %588 = vmatprep.mubr.f32.mxu0 0.0
    %589 = vmatmul.mubr.f32.gmra.mxu0 %v522
    %v590 = vpop.f32.mrf.mxu0
    %v591 = vadd.f32 0.0, %v590
    %v592 = vpop.f32.mrf.mxu0
    %593 = vdwg.mxu0
    %v595 = vrot.slane %v591, 2
    %v597 = vadd.f32 %v182, %v595
    %v598 = vtanh.pop %v597
    %v599 = vxor.u32 %v597, 2147483648
    %v600 = vmul.f32 %v599, 1.442695
    %v601 = vpow.pop %v600
    %v602 = vadd.f32 %v601, 1.0
    %v603 = vrcp.pop %v602
    %v604 = vmul.f32 1.0, %v603
    %v605 = vsel %vm92, %v598, %v604
    %v607 = vrot.slane %v506, 6
    %v609 = vmul.f32 %v605, %v607
    %611 = vrot.lane.b32.xlu0 %v605, 64
    %v612 = vpop.permute.xlu0 %611
    %v614 = vmul.f32 %v605, %v612
    %616 = vrot.lane.b32.xlu0 %v614, 32
    %v617 = vpop.permute.xlu0 %616
    %v619 = vadd.f32 %v609, %v617
    %v620 = vtanh.pop %v619
    %622 = vrot.lane.b32.xlu0 %v620, 64
    %v623 = vpop.permute.xlu0 %622
    %v625 = vmul.f32 %v605, %v623
    %627 = vrot.lane.b32.xlu0 %v625, 32
    %v628 = vpop.permute.xlu0 %627
    %vm630 = vcmask 261126
    %631 = vst.msk [vmem:[#allocation2] sm:$0xc0] %vm630, %v628
    %v632 = vrot.slane %v625, 6
    %633 = vrot.lane.b32.xlu0 %v632, 32
    %v634 = vpop.permute.xlu0 %633
    %v635 = vsel %vm190, %v634, 0
    %637 = vmatprep.subr.mxu0 0.0
    %638 = vmatpush1.msra.mxu0 0.0
    %639 = vmatprep.subr.mxu0 0.0
    %640 = vmatpush1.msra.mxu0 0.0
    %641 = vmatprep.subr.mxu0 0.0
    %642 = vmatpush1.msra.mxu0 0.0
    %643 = vmatprep.subr.mxu0 0.0
    %644 = vmatpush1.msra.mxu0 0.0
    %645 = vmatprep.subr.mxu0 0.0
    %646 = vmatpush1.msra.mxu0 0.0
    %647 = vmatprep.subr.mxu0 0.0
    %648 = vmatpush1.msra.mxu0 0.0
    %649 = vmatprep.subr.mxu0 0.0
    %650 = vmatpush1.msra.mxu0 0.0
    %651 = vmatprep.subr.mxu0 0.0
    %652 = vmatpush1.msra.mxu0 0.0
    %653 = vmatprep.subr.mxu0 0.0
    %654 = vmatpush1.msra.mxu0 0.0
    %655 = vmatprep.subr.mxu0 0.0
    %656 = vmatpush1.msra.mxu0 0.0
    %657 = vmatprep.subr.mxu0 0.0
    %658 = vmatpush1.msra.mxu0 0.0
    %659 = vmatprep.subr.mxu0 0.0
    %660 = vmatpush1.msra.mxu0 0.0
    %661 = vmatprep.subr.mxu0 0.0
    %662 = vmatpush1.msra.mxu0 %v100
    %663 = vmatprep.subr.mxu0 0.0
    %664 = vmatpush1.msra.mxu0 %v99
    %665 = vmatprep.subr.mxu0 0.0
    %666 = vmatpush1.msra.mxu0 %v98
    %667 = vmatprep.subr.mxu0 0.0
    %668 = vmatpush1.msra.mxu0 %v97
    %669 = vmatprep.subr.mxu0 0.0
    %670 = vmatpush2.msra.mxu0 0.0
    %671 = vmatprep.subr.mxu0 0.0
    %672 = vmatpush2.msra.mxu0 0.0
    %673 = vmatprep.subr.mxu0 0.0
    %674 = vmatpush2.msra.mxu0 0.0
    %675 = vmatprep.subr.mxu0 0.0
    %676 = vmatpush2.msra.mxu0 0.0
    %677 = vmatprep.subr.mxu0 0.0
    %678 = vmatpush2.msra.mxu0 0.0
    %679 = vmatprep.subr.mxu0 0.0
    %680 = vmatpush2.msra.mxu0 0.0
    %681 = vmatprep.subr.mxu0 0.0
    %682 = vmatpush2.msra.mxu0 0.0
    %683 = vmatprep.subr.mxu0 0.0
    %684 = vmatpush2.msra.mxu0 0.0
    %685 = vmatprep.subr.mxu0 0.0
    %686 = vmatpush2.msra.mxu0 0.0
    %687 = vmatprep.subr.mxu0 0.0
    %688 = vmatpush2.msra.mxu0 0.0
    %689 = vmatprep.subr.mxu0 0.0
    %690 = vmatpush2.msra.mxu0 0.0
    %691 = vmatprep.subr.mxu0 0.0
    %692 = vmatpush2.msra.mxu0 0.0
    %693 = vmatprep.subr.mxu0 0.0
    %694 = vmatpush2.msra.mxu0 0.0
    %695 = vmatprep.subr.mxu0 0.0
    %696 = vmatpush2.msra.mxu0 0.0
    %697 = vmatprep.subr.mxu0 0.0
    %698 = vmatpush2.msra.mxu0 0.0
    %699 = vmatprep.subr.mxu0 0.0
    %700 = vmatpush2.msra.mxu0 0.0
    %701 = vmatprep.mubr.f32.mxu0 0.0
    %702 = vmatmul.mubr.f32.gmra.mxu0 %v635
    %v703 = vpop.f32.mrf.mxu0
    %v704 = vadd.f32 0.0, %v703
    %v705 = vpop.f32.mrf.mxu0
    %706 = vdwg.mxu0
    %v707 = vadd.f32 %v187, %v704
    %v708 = vtanh.pop %v707
    %v709 = vxor.u32 %v707, 2147483648
    %v710 = vmul.f32 %v709, 1.442695
    %v711 = vpow.pop %v710
    %v712 = vadd.f32 %v711, 1.0
    %v713 = vrcp.pop %v712
    %v714 = vmul.f32 1.0, %v713
    %v715 = vsel %vm92, %v708, %v714
    %v717 = vrot.slane %v619, 6
    %v719 = vmul.f32 %v715, %v717
    %721 = vrot.lane.b32.xlu0 %v715, 64
    %v722 = vpop.permute.xlu0 %721
    %v724 = vmul.f32 %v715, %v722
    %726 = vrot.lane.b32.xlu0 %v724, 32
    %v727 = vpop.permute.xlu0 %726
    %v729 = vadd.f32 %v719, %v727
    %v730 = vtanh.pop %v729
    %732 = vrot.lane.b32.xlu0 %v730, 64
    %v733 = vpop.permute.xlu0 %732
    %v735 = vmul.f32 %v715, %v733
    %737 = vrot.lane.b32.xlu0 %v735, 32
    %v738 = vpop.permute.xlu0 %737
    %740 = vst.msk [vmem:[#allocation2 + $0x8] sm:$0x3] %vm294, %v738
    %v741 = vsel %vm190, %v738, 0
    %743 = vmatprep.subr.mxu0 0.0
    %744 = vmatpush1.msra.mxu0 0.0
    %745 = vmatprep.subr.mxu0 0.0
    %746 = vmatpush1.msra.mxu0 0.0
    %747 = vmatprep.subr.mxu0 0.0
    %748 = vmatpush1.msra.mxu0 0.0
    %749 = vmatprep.subr.mxu0 0.0
    %750 = vmatpush1.msra.mxu0 0.0
    %751 = vmatprep.subr.mxu0 0.0
    %752 = vmatpush1.msra.mxu0 0.0
    %753 = vmatprep.subr.mxu0 0.0
    %754 = vmatpush1.msra.mxu0 0.0
    %755 = vmatprep.subr.mxu0 0.0
    %756 = vmatpush1.msra.mxu0 0.0
    %757 = vmatprep.subr.mxu0 0.0
    %758 = vmatpush1.msra.mxu0 0.0
    %759 = vmatprep.subr.mxu0 0.0
    %760 = vmatpush1.msra.mxu0 0.0
    %761 = vmatprep.subr.mxu0 0.0
    %762 = vmatpush1.msra.mxu0 0.0
    %763 = vmatprep.subr.mxu0 0.0
    %764 = vmatpush1.msra.mxu0 0.0
    %765 = vmatprep.subr.mxu0 0.0
    %766 = vmatpush1.msra.mxu0 0.0
    %767 = vmatprep.subr.mxu0 0.0
    %768 = vmatpush1.msra.mxu0 %v100
    %769 = vmatprep.subr.mxu0 0.0
    %770 = vmatpush1.msra.mxu0 %v99
    %771 = vmatprep.subr.mxu0 0.0
    %772 = vmatpush1.msra.mxu0 %v98
    %773 = vmatprep.subr.mxu0 0.0
    %774 = vmatpush1.msra.mxu0 %v97
    %775 = vmatprep.subr.mxu0 0.0
    %776 = vmatpush2.msra.mxu0 0.0
    %777 = vmatprep.subr.mxu0 0.0
    %778 = vmatpush2.msra.mxu0 0.0
    %779 = vmatprep.subr.mxu0 0.0
    %780 = vmatpush2.msra.mxu0 0.0
    %781 = vmatprep.subr.mxu0 0.0
    %782 = vmatpush2.msra.mxu0 0.0
    %783 = vmatprep.subr.mxu0 0.0
    %784 = vmatpush2.msra.mxu0 0.0
    %785 = vmatprep.subr.mxu0 0.0
    %786 = vmatpush2.msra.mxu0 0.0
    %787 = vmatprep.subr.mxu0 0.0
    %788 = vmatpush2.msra.mxu0 0.0
    %789 = vmatprep.subr.mxu0 0.0
    %790 = vmatpush2.msra.mxu0 0.0
    %791 = vmatprep.subr.mxu0 0.0
    %792 = vmatpush2.msra.mxu0 0.0
    %793 = vmatprep.subr.mxu0 0.0
    %794 = vmatpush2.msra.mxu0 0.0
    %795 = vmatprep.subr.mxu0 0.0
    %796 = vmatpush2.msra.mxu0 0.0
    %797 = vmatprep.subr.mxu0 0.0
    %798 = vmatpush2.msra.mxu0 0.0
    %799 = vmatprep.subr.mxu0 0.0
    %800 = vmatpush2.msra.mxu0 0.0
    %801 = vmatprep.subr.mxu0 0.0
    %802 = vmatpush2.msra.mxu0 0.0
    %803 = vmatprep.subr.mxu0 0.0
    %804 = vmatpush2.msra.mxu0 0.0
    %805 = vmatprep.subr.mxu0 0.0
    %806 = vmatpush2.msra.mxu0 0.0
    %807 = vmatprep.mubr.f32.mxu0 0.0
    %808 = vmatmul.mubr.f32.gmra.mxu0 %v741
    %v809 = vpop.f32.mrf.mxu0
    %v810 = vadd.f32 0.0, %v809
    %v811 = vpop.f32.mrf.mxu0
    %812 = vdwg.mxu0
    %v814 = vrot.slane %v810, 6
    %v816 = vadd.f32 %v187, %v814
    %v817 = vtanh.pop %v816
    %v818 = vxor.u32 %v816, 2147483648
    %v819 = vmul.f32 %v818, 1.442695
    %v820 = vpow.pop %v819
    %v821 = vadd.f32 %v820, 1.0
    %v822 = vrcp.pop %v821
    %v823 = vmul.f32 1.0, %v822
    %v824 = vsel %vm92, %v817, %v823
    %v826 = vrot.slane %v729, 6
    %v828 = vmul.f32 %v824, %v826
    %830 = vrot.lane.b32.xlu0 %v824, 64
    %v831 = vpop.permute.xlu0 %830
    %v833 = vmul.f32 %v824, %v831
    %835 = vrot.lane.b32.xlu0 %v833, 32
    %v836 = vpop.permute.xlu0 %835
    %v838 = vadd.f32 %v828, %v836
    %v839 = vtanh.pop %v838
    %841 = vrot.lane.b32.xlu0 %v839, 64
    %v842 = vpop.permute.xlu0 %841
    %v844 = vmul.f32 %v824, %v842
    %846 = vrot.lane.b32.xlu0 %v844, 32
    %v847 = vpop.permute.xlu0 %846
    %849 = vst.msk [vmem:[#allocation2 + $0x8] sm:$0xc] %vm404, %v847
    %v850 = vrot.slane %v844, 2
    %851 = vrot.lane.b32.xlu0 %v850, 32
    %v852 = vpop.permute.xlu0 %851
    %v853 = vsel %vm190, %v852, 0
    %855 = vmatprep.subr.mxu0 0.0
    %856 = vmatpush1.msra.mxu0 0.0
    %857 = vmatprep.subr.mxu0 0.0
    %858 = vmatpush1.msra.mxu0 0.0
    %859 = vmatprep.subr.mxu0 0.0
    %860 = vmatpush1.msra.mxu0 0.0
    %861 = vmatprep.subr.mxu0 0.0
    %862 = vmatpush1.msra.mxu0 0.0
    %863 = vmatprep.subr.mxu0 0.0
    %864 = vmatpush1.msra.mxu0 0.0
    %865 = vmatprep.subr.mxu0 0.0
    %866 = vmatpush1.msra.mxu0 0.0
    %867 = vmatprep.subr.mxu0 0.0
    %868 = vmatpush1.msra.mxu0 0.0
    %869 = vmatprep.subr.mxu0 0.0
    %870 = vmatpush1.msra.mxu0 0.0
    %871 = vmatprep.subr.mxu0 0.0
    %872 = vmatpush1.msra.mxu0 0.0
    %873 = vmatprep.subr.mxu0 0.0
    %874 = vmatpush1.msra.mxu0 0.0
    %875 = vmatprep.subr.mxu0 0.0
    %876 = vmatpush1.msra.mxu0 0.0
    %877 = vmatprep.subr.mxu0 0.0
    %878 = vmatpush1.msra.mxu0 0.0
    %879 = vmatprep.subr.mxu0 0.0
    %880 = vmatpush1.msra.mxu0 %v100
    %881 = vmatprep.subr.mxu0 0.0
    %882 = vmatpush1.msra.mxu0 %v99
    %883 = vmatprep.subr.mxu0 0.0
    %884 = vmatpush1.msra.mxu0 %v98
    %885 = vmatprep.subr.mxu0 0.0
    %886 = vmatpush1.msra.mxu0 %v97
    %887 = vmatprep.subr.mxu0 0.0
    %888 = vmatpush2.msra.mxu0 0.0
    %889 = vmatprep.subr.mxu0 0.0
    %890 = vmatpush2.msra.mxu0 0.0
    %891 = vmatprep.subr.mxu0 0.0
    %892 = vmatpush2.msra.mxu0 0.0
    %893 = vmatprep.subr.mxu0 0.0
    %894 = vmatpush2.msra.mxu0 0.0
    %895 = vmatprep.subr.mxu0 0.0
    %896 = vmatpush2.msra.mxu0 0.0
    %897 = vmatprep.subr.mxu0 0.0
    %898 = vmatpush2.msra.mxu0 0.0
    %899 = vmatprep.subr.mxu0 0.0
    %900 = vmatpush2.msra.mxu0 0.0
    %901 = vmatprep.subr.mxu0 0.0
    %902 = vmatpush2.msra.mxu0 0.0
    %903 = vmatprep.subr.mxu0 0.0
    %904 = vmatpush2.msra.mxu0 0.0
    %905 = vmatprep.subr.mxu0 0.0
    %906 = vmatpush2.msra.mxu0 0.0
    %907 = vmatprep.subr.mxu0 0.0
    %908 = vmatpush2.msra.mxu0 0.0
    %909 = vmatprep.subr.mxu0 0.0
    %910 = vmatpush2.msra.mxu0 0.0
    %911 = vmatprep.subr.mxu0 0.0
    %912 = vmatpush2.msra.mxu0 0.0
    %913 = vmatprep.subr.mxu0 0.0
    %914 = vmatpush2.msra.mxu0 0.0
    %915 = vmatprep.subr.mxu0 0.0
    %916 = vmatpush2.msra.mxu0 0.0
    %917 = vmatprep.subr.mxu0 0.0
    %918 = vmatpush2.msra.mxu0 0.0
    %919 = vmatprep.mubr.f32.mxu0 0.0
    %920 = vmatmul.mubr.f32.gmra.mxu0 %v853
    %v921 = vpop.f32.mrf.mxu0
    %v922 = vadd.f32 0.0, %v921
    %v923 = vpop.f32.mrf.mxu0
    %924 = vdwg.mxu0
    %v926 = vrot.slane %v922, 4
    %v928 = vadd.f32 %v187, %v926
    %v929 = vtanh.pop %v928
    %v930 = vxor.u32 %v928, 2147483648
    %v931 = vmul.f32 %v930, 1.442695
    %v932 = vpow.pop %v931
    %v933 = vadd.f32 %v932, 1.0
    %v934 = vrcp.pop %v933
    %v935 = vmul.f32 1.0, %v934
    %v936 = vsel %vm92, %v929, %v935
    %v938 = vrot.slane %v838, 6
    %v940 = vmul.f32 %v936, %v938
    %942 = vrot.lane.b32.xlu0 %v936, 64
    %v943 = vpop.permute.xlu0 %942
    %v945 = vmul.f32 %v936, %v943
    %947 = vrot.lane.b32.xlu0 %v945, 32
    %v948 = vpop.permute.xlu0 %947
    %v950 = vadd.f32 %v940, %v948
    %v951 = vtanh.pop %v950
    %953 = vrot.lane.b32.xlu0 %v951, 64
    %v954 = vpop.permute.xlu0 %953
    %v956 = vmul.f32 %v936, %v954
    %958 = vrot.lane.b32.xlu0 %v956, 32
    %v959 = vpop.permute.xlu0 %958
    %961 = vst.msk [vmem:[#allocation2 + $0x8] sm:$0x30] %vm517, %v959
    %v962 = vrot.slane %v956, 4
    %963 = vrot.lane.b32.xlu0 %v962, 32
    %v964 = vpop.permute.xlu0 %963
    %v965 = vsel %vm190, %v964, 0
    %967 = vmatprep.subr.mxu0 0.0
    %968 = vmatpush1.msra.mxu0 0.0
    %969 = vmatprep.subr.mxu0 0.0
    %970 = vmatpush1.msra.mxu0 0.0
    %971 = vmatprep.subr.mxu0 0.0
    %972 = vmatpush1.msra.mxu0 0.0
    %973 = vmatprep.subr.mxu0 0.0
    %974 = vmatpush1.msra.mxu0 0.0
    %975 = vmatprep.subr.mxu0 0.0
    %976 = vmatpush1.msra.mxu0 0.0
    %977 = vmatprep.subr.mxu0 0.0
    %978 = vmatpush1.msra.mxu0 0.0
    %979 = vmatprep.subr.mxu0 0.0
    %980 = vmatpush1.msra.mxu0 0.0
    %981 = vmatprep.subr.mxu0 0.0
    %982 = vmatpush1.msra.mxu0 0.0
    %983 = vmatprep.subr.mxu0 0.0
    %984 = vmatpush1.msra.mxu0 0.0
    %985 = vmatprep.subr.mxu0 0.0
    %986 = vmatpush1.msra.mxu0 0.0
    %987 = vmatprep.subr.mxu0 0.0
    %988 = vmatpush1.msra.mxu0 0.0
    %989 = vmatprep.subr.mxu0 0.0
    %990 = vmatpush1.msra.mxu0 0.0
    %991 = vmatprep.subr.mxu0 0.0
    %992 = vmatpush1.msra.mxu0 %v100
    %993 = vmatprep.subr.mxu0 0.0
    %994 = vmatpush1.msra.mxu0 %v99
    %995 = vmatprep.subr.mxu0 0.0
    %996 = vmatpush1.msra.mxu0 %v98
    %997 = vmatprep.subr.mxu0 0.0
    %998 = vmatpush1.msra.mxu0 %v97
    %999 = vmatprep.subr.mxu0 0.0
    %1000 = vmatpush2.msra.mxu0 0.0
    %1001 = vmatprep.subr.mxu0 0.0
    %1002 = vmatpush2.msra.mxu0 0.0
    %1003 = vmatprep.subr.mxu0 0.0
    %1004 = vmatpush2.msra.mxu0 0.0
    %1005 = vmatprep.subr.mxu0 0.0
    %1006 = vmatpush2.msra.mxu0 0.0
    %1007 = vmatprep.subr.mxu0 0.0
    %1008 = vmatpush2.msra.mxu0 0.0
    %1009 = vmatprep.subr.mxu0 0.0
    %1010 = vmatpush2.msra.mxu0 0.0
    %1011 = vmatprep.subr.mxu0 0.0
    %1012 = vmatpush2.msra.mxu0 0.0
    %1013 = vmatprep.subr.mxu0 0.0
    %1014 = vmatpush2.msra.mxu0 0.0
    %1015 = vmatprep.subr.mxu0 0.0
    %1016 = vmatpush2.msra.mxu0 0.0
    %1017 = vmatprep.subr.mxu0 0.0
    %1018 = vmatpush2.msra.mxu0 0.0
    %1019 = vmatprep.subr.mxu0 0.0
    %1020 = vmatpush2.msra.mxu0 0.0
    %1021 = vmatprep.subr.mxu0 0.0
    %1022 = vmatpush2.msra.mxu0 0.0
    %1023 = vmatprep.subr.mxu0 0.0
    %1024 = vmatpush2.msra.mxu0 0.0
    %1025 = vmatprep.subr.mxu0 0.0
    %1026 = vmatpush2.msra.mxu0 0.0
    %1027 = vmatprep.subr.mxu0 0.0
    %1028 = vmatpush2.msra.mxu0 0.0
    %1029 = vmatprep.subr.mxu0 0.0
    %1030 = vmatpush2.msra.mxu0 0.0
    %1031 = vmatprep.mubr.f32.mxu0 0.0
    %1032 = vmatmul.mubr.f32.gmra.mxu0 %v965
    %v1033 = vpop.f32.mrf.mxu0
    %v1034 = vadd.f32 0.0, %v1033
    %v1035 = vpop.f32.mrf.mxu0
    %1036 = vdwg.mxu0
    %v1038 = vrot.slane %v1034, 2
    %v1040 = vadd.f32 %v187, %v1038
    %v1041 = vtanh.pop %v1040
    %v1042 = vxor.u32 %v1040, 2147483648
    %v1043 = vmul.f32 %v1042, 1.442695
    %v1044 = vpow.pop %v1043
    %v1045 = vadd.f32 %v1044, 1.0
    %v1046 = vrcp.pop %v1045
    %v1047 = vmul.f32 1.0, %v1046
    %v1048 = vsel %vm92, %v1041, %v1047
    %v1050 = vrot.slane %v950, 6
    %v1052 = vmul.f32 %v1048, %v1050
    %1054 = vrot.lane.b32.xlu0 %v1048, 64
    %v1055 = vpop.permute.xlu0 %1054
    %v1057 = vmul.f32 %v1048, %v1055
    %1059 = vrot.lane.b32.xlu0 %v1057, 32
    %v1060 = vpop.permute.xlu0 %1059
    %v1062 = vadd.f32 %v1052, %v1060
    %v1063 = vtanh.pop %v1062
    %1065 = vrot.lane.b32.xlu0 %v1063, 64
    %v1066 = vpop.permute.xlu0 %1065
    %v1068 = vmul.f32 %v1048, %v1066
    %1070 = vrot.lane.b32.xlu0 %v1068, 32
    %v1071 = vpop.permute.xlu0 %1070
    %1073 = vst.msk [vmem:[#allocation2 + $0x8] sm:$0xc0] %vm630, %v1071
    %v1074 = vld [vmem:[#allocation2] sm:$0xff]
    %v1075 = vld [vmem:[#allocation2 + $0x8] sm:$0xff]
    %v1076 = vld [vmem:[#allocation8] sm:$0xff]
    %v1077 = vld [vmem:[#allocation8 + $0x8] sm:$0xff]
    %v1078 = vld [vmem:[#allocation8 + $0x10] sm:$0xff]
    %v1079 = vld [vmem:[#allocation8 + $0x18] sm:$0xff]
    %v1080 = vld [vmem:[#allocation9] sm:$0xff]
    %v1081 = vld [vmem:[#allocation9 + $0x8] sm:$0xff]
    %v1082 = vld [vmem:[#allocation9 + $0x10] sm:$0xff]
    %v1083 = vld [vmem:[#allocation9 + $0x18] sm:$0xff]
    %v1084 = vld [vmem:[%s6] sm:$0x1]
    %v1086 = vlaneseq
    %v1087 = vshrl.u32 %v1086, 7
    %v1088 = vsub.s32 0, %v1087
    %v1089 = vrot.slane %v1084, %v1088
    %v1092 = vsel %vm190, %v1074, 0
    %v1095 = vsel %vm190, %v1075, 0
    %1097 = vmatprep.subr.mxu0 0.0
    %1098 = vmatpush1.msra.mxu0 0.0
    %1099 = vmatprep.subr.mxu0 0.0
    %1100 = vmatpush1.msra.mxu0 0.0
    %1101 = vmatprep.subr.mxu0 0.0
    %1102 = vmatpush1.msra.mxu0 0.0
    %1103 = vmatprep.subr.mxu0 0.0
    %1104 = vmatpush1.msra.mxu0 0.0
    %1105 = vmatprep.subr.mxu0 0.0
    %1106 = vmatpush1.msra.mxu0 0.0
    %1107 = vmatprep.subr.mxu0 0.0
    %1108 = vmatpush1.msra.mxu0 0.0
    %1109 = vmatprep.subr.mxu0 0.0
    %1110 = vmatpush1.msra.mxu0 0.0
    %1111 = vmatprep.subr.mxu0 0.0
    %1112 = vmatpush1.msra.mxu0 0.0
    %1113 = vmatprep.subr.mxu0 0.0
    %1114 = vmatpush1.msra.mxu0 0.0
    %1115 = vmatprep.subr.mxu0 0.0
    %1116 = vmatpush1.msra.mxu0 0.0
    %1117 = vmatprep.subr.mxu0 0.0
    %1118 = vmatpush1.msra.mxu0 0.0
    %1119 = vmatprep.subr.mxu0 0.0
    %1120 = vmatpush1.msra.mxu0 0.0
    %1121 = vmatprep.subr.mxu0 0.0
    %1122 = vmatpush1.msra.mxu0 %v1079
    %1123 = vmatprep.subr.mxu0 0.0
    %1124 = vmatpush1.msra.mxu0 %v1078
    %1125 = vmatprep.subr.mxu0 0.0
    %1126 = vmatpush1.msra.mxu0 %v1077
    %1127 = vmatprep.subr.mxu0 0.0
    %1128 = vmatpush1.msra.mxu0 %v1076
    %1129 = vmatprep.subr.mxu0 0.0
    %1130 = vmatpush2.msra.mxu0 0.0
    %1131 = vmatprep.subr.mxu0 0.0
    %1132 = vmatpush2.msra.mxu0 0.0
    %1133 = vmatprep.subr.mxu0 0.0
    %1134 = vmatpush2.msra.mxu0 0.0
    %1135 = vmatprep.subr.mxu0 0.0
    %1136 = vmatpush2.msra.mxu0 0.0
    %1137 = vmatprep.subr.mxu0 0.0
    %1138 = vmatpush2.msra.mxu0 0.0
    %1139 = vmatprep.subr.mxu0 0.0
    %1140 = vmatpush2.msra.mxu0 0.0
    %1141 = vmatprep.subr.mxu0 0.0
    %1142 = vmatpush2.msra.mxu0 0.0
    %1143 = vmatprep.subr.mxu0 0.0
    %1144 = vmatpush2.msra.mxu0 0.0
    %1145 = vmatprep.subr.mxu0 0.0
    %1146 = vmatpush2.msra.mxu0 0.0
    %1147 = vmatprep.subr.mxu0 0.0
    %1148 = vmatpush2.msra.mxu0 0.0
    %1149 = vmatprep.subr.mxu0 0.0
    %1150 = vmatpush2.msra.mxu0 0.0
    %1151 = vmatprep.subr.mxu0 0.0
    %1152 = vmatpush2.msra.mxu0 0.0
    %1153 = vmatprep.subr.mxu0 0.0
    %1154 = vmatpush2.msra.mxu0 0.0
    %1155 = vmatprep.subr.mxu0 0.0
    %1156 = vmatpush2.msra.mxu0 0.0
    %1157 = vmatprep.subr.mxu0 0.0
    %1158 = vmatpush2.msra.mxu0 0.0
    %1159 = vmatprep.subr.mxu0 0.0
    %1160 = vmatpush2.msra.mxu0 0.0
    %1161 = vmatprep.mubr.f32.mxu0 0.0
    %1162 = vmatmul.mubr.f32.gmra.mxu0 %v1092
    %v1163 = vpop.f32.mrf.mxu0
    %v1164 = vadd.f32 %v1089, %v1163
    %v1165 = vpop.f32.mrf.mxu0
    %1166 = vmatprep.mubr.f32.mxu0 0.0
    %1167 = vmatmul.mubr.f32.gmra.mxu0 %v1095
    %v1168 = vpop.f32.mrf.mxu0
    %v1169 = vadd.f32 %v1089, %v1168
    %v1170 = vpop.f32.mrf.mxu0
    %1171 = vdwg.mxu0
    %1172 = vmatprep.subr.mxu0 0.0
    %1173 = vmatpush1.msra.mxu0 0.0
    %1174 = vmatprep.subr.mxu0 0.0
    %1175 = vmatpush1.msra.mxu0 0.0
    %1176 = vmatprep.subr.mxu0 0.0
    %1177 = vmatpush1.msra.mxu0 0.0
    %1178 = vmatprep.subr.mxu0 0.0
    %1179 = vmatpush1.msra.mxu0 0.0
    %1180 = vmatprep.subr.mxu0 0.0
    %1181 = vmatpush1.msra.mxu0 0.0
    %1182 = vmatprep.subr.mxu0 0.0
    %1183 = vmatpush1.msra.mxu0 0.0
    %1184 = vmatprep.subr.mxu0 0.0
    %1185 = vmatpush1.msra.mxu0 0.0
    %1186 = vmatprep.subr.mxu0 0.0
    %1187 = vmatpush1.msra.mxu0 0.0
    %1188 = vmatprep.subr.mxu0 0.0
    %1189 = vmatpush1.msra.mxu0 0.0
    %1190 = vmatprep.subr.mxu0 0.0
    %1191 = vmatpush1.msra.mxu0 0.0
    %1192 = vmatprep.subr.mxu0 0.0
    %1193 = vmatpush1.msra.mxu0 0.0
    %1194 = vmatprep.subr.mxu0 0.0
    %1195 = vmatpush1.msra.mxu0 0.0
    %1196 = vmatprep.subr.mxu0 0.0
    %1197 = vmatpush1.msra.mxu0 %v1083
    %1198 = vmatprep.subr.mxu0 0.0
    %1199 = vmatpush1.msra.mxu0 %v1082
    %1200 = vmatprep.subr.mxu0 0.0
    %1201 = vmatpush1.msra.mxu0 %v1081
    %1202 = vmatprep.subr.mxu0 0.0
    %1203 = vmatpush1.msra.mxu0 %v1080
    %1204 = vmatprep.subr.mxu0 0.0
    %1205 = vmatpush2.msra.mxu0 0.0
    %1206 = vmatprep.subr.mxu0 0.0
    %1207 = vmatpush2.msra.mxu0 0.0
    %1208 = vmatprep.subr.mxu0 0.0
    %1209 = vmatpush2.msra.mxu0 0.0
    %1210 = vmatprep.subr.mxu0 0.0
    %1211 = vmatpush2.msra.mxu0 0.0
    %1212 = vmatprep.subr.mxu0 0.0
    %1213 = vmatpush2.msra.mxu0 0.0
    %1214 = vmatprep.subr.mxu0 0.0
    %1215 = vmatpush2.msra.mxu0 0.0
    %1216 = vmatprep.subr.mxu0 0.0
    %1217 = vmatpush2.msra.mxu0 0.0
    %1218 = vmatprep.subr.mxu0 0.0
    %1219 = vmatpush2.msra.mxu0 0.0
    %1220 = vmatprep.subr.mxu0 0.0
    %1221 = vmatpush2.msra.mxu0 0.0
    %1222 = vmatprep.subr.mxu0 0.0
    %1223 = vmatpush2.msra.mxu0 0.0
    %1224 = vmatprep.subr.mxu0 0.0
    %1225 = vmatpush2.msra.mxu0 0.0
    %1226 = vmatprep.subr.mxu0 0.0
    %1227 = vmatpush2.msra.mxu0 0.0
    %1228 = vmatprep.subr.mxu0 0.0
    %1229 = vmatpush2.msra.mxu0 0.0
    %1230 = vmatprep.subr.mxu0 0.0
    %1231 = vmatpush2.msra.mxu0 0.0
    %1232 = vmatprep.subr.mxu0 0.0
    %1233 = vmatpush2.msra.mxu0 0.0
    %1234 = vmatprep.subr.mxu0 0.0
    %1235 = vmatpush2.msra.mxu0 0.0
    %1236 = vmatprep.mubr.f32.mxu0 0.0
    %1237 = vmatmul.mubr.f32.gmra.mxu0 %v192
    %v1238 = vpop.f32.mrf.mxu0
    %v1239 = vadd.f32 0.0, %v1238
    %v1240 = vpop.f32.mrf.mxu0
    %1241 = vdwg.mxu0
    %v1242 = vadd.f32 %v1164, %v1239
    %v1243 = vtanh.pop %v1242
    %v1244 = vxor.u32 %v1242, 2147483648
    %v1245 = vmul.f32 %v1244, 1.442695
    %v1246 = vpow.pop %v1245
    %v1247 = vadd.f32 %v1246, 1.0
    %v1248 = vrcp.pop %v1247
    %v1249 = vmul.f32 1.0, %v1248
    %v1250 = vsel %vm92, %v1243, %v1249
    %v1251 = vmul.f32 %v1250, 0.0
    %1253 = vrot.lane.b32.xlu0 %v1250, 64
    %v1254 = vpop.permute.xlu0 %1253
    %v1256 = vmul.f32 %v1250, %v1254
    %1258 = vrot.lane.b32.xlu0 %v1256, 32
    %v1259 = vpop.permute.xlu0 %1258
    %v1261 = vadd.f32 %v1251, %v1259
    %v1262 = vtanh.pop %v1261
    %1264 = vrot.lane.b32.xlu0 %v1262, 64
    %v1265 = vpop.permute.xlu0 %1264
    %v1267 = vmul.f32 %v1250, %v1265
    %1269 = vrot.lane.b32.xlu0 %v1267, 32
    %v1270 = vpop.permute.xlu0 %1269
    %v1271 = vsel %vm190, %v1270, 0
    %1273 = vmatprep.subr.mxu0 0.0
    %1274 = vmatpush1.msra.mxu0 0.0
    %1275 = vmatprep.subr.mxu0 0.0
    %1276 = vmatpush1.msra.mxu0 0.0
    %1277 = vmatprep.subr.mxu0 0.0
    %1278 = vmatpush1.msra.mxu0 0.0
    %1279 = vmatprep.subr.mxu0 0.0
    %1280 = vmatpush1.msra.mxu0 0.0
    %1281 = vmatprep.subr.mxu0 0.0
    %1282 = vmatpush1.msra.mxu0 0.0
    %1283 = vmatprep.subr.mxu0 0.0
    %1284 = vmatpush1.msra.mxu0 0.0
    %1285 = vmatprep.subr.mxu0 0.0
    %1286 = vmatpush1.msra.mxu0 0.0
    %1287 = vmatprep.subr.mxu0 0.0
    %1288 = vmatpush1.msra.mxu0 0.0
    %1289 = vmatprep.subr.mxu0 0.0
    %1290 = vmatpush1.msra.mxu0 0.0
    %1291 = vmatprep.subr.mxu0 0.0
    %1292 = vmatpush1.msra.mxu0 0.0
    %1293 = vmatprep.subr.mxu0 0.0
    %1294 = vmatpush1.msra.mxu0 0.0
    %1295 = vmatprep.subr.mxu0 0.0
    %1296 = vmatpush1.msra.mxu0 0.0
    %1297 = vmatprep.subr.mxu0 0.0
    %1298 = vmatpush1.msra.mxu0 %v1083
    %1299 = vmatprep.subr.mxu0 0.0
    %1300 = vmatpush1.msra.mxu0 %v1082
    %1301 = vmatprep.subr.mxu0 0.0
    %1302 = vmatpush1.msra.mxu0 %v1081
    %1303 = vmatprep.subr.mxu0 0.0
    %1304 = vmatpush1.msra.mxu0 %v1080
    %1305 = vmatprep.subr.mxu0 0.0
    %1306 = vmatpush2.msra.mxu0 0.0
    %1307 = vmatprep.subr.mxu0 0.0
    %1308 = vmatpush2.msra.mxu0 0.0
    %1309 = vmatprep.subr.mxu0 0.0
    %1310 = vmatpush2.msra.mxu0 0.0
    %1311 = vmatprep.subr.mxu0 0.0
    %1312 = vmatpush2.msra.mxu0 0.0
    %1313 = vmatprep.subr.mxu0 0.0
    %1314 = vmatpush2.msra.mxu0 0.0
    %1315 = vmatprep.subr.mxu0 0.0
    %1316 = vmatpush2.msra.mxu0 0.0
    %1317 = vmatprep.subr.mxu0 0.0
    %1318 = vmatpush2.msra.mxu0 0.0
    %1319 = vmatprep.subr.mxu0 0.0
    %1320 = vmatpush2.msra.mxu0 0.0
    %1321 = vmatprep.subr.mxu0 0.0
    %1322 = vmatpush2.msra.mxu0 0.0
    %1323 = vmatprep.subr.mxu0 0.0
    %1324 = vmatpush2.msra.mxu0 0.0
    %1325 = vmatprep.subr.mxu0 0.0
    %1326 = vmatpush2.msra.mxu0 0.0
    %1327 = vmatprep.subr.mxu0 0.0
    %1328 = vmatpush2.msra.mxu0 0.0
    %1329 = vmatprep.subr.mxu0 0.0
    %1330 = vmatpush2.msra.mxu0 0.0
    %1331 = vmatprep.subr.mxu0 0.0
    %1332 = vmatpush2.msra.mxu0 0.0
    %1333 = vmatprep.subr.mxu0 0.0
    %1334 = vmatpush2.msra.mxu0 0.0
    %1335 = vmatprep.subr.mxu0 0.0
    %1336 = vmatpush2.msra.mxu0 0.0
    %1337 = vmatprep.mubr.f32.mxu0 0.0
    %1338 = vmatmul.mubr.f32.gmra.mxu0 %v1271
    %v1339 = vpop.f32.mrf.mxu0
    %v1340 = vadd.f32 0.0, %v1339
    %v1341 = vpop.f32.mrf.mxu0
    %1342 = vdwg.mxu0
    %v1344 = vrot.slane %v1340, 6
    %v1346 = vadd.f32 %v1164, %v1344
    %v1347 = vtanh.pop %v1346
    %v1348 = vxor.u32 %v1346, 2147483648
    %v1349 = vmul.f32 %v1348, 1.442695
    %v1350 = vpow.pop %v1349
    %v1351 = vadd.f32 %v1350, 1.0
    %v1352 = vrcp.pop %v1351
    %v1353 = vmul.f32 1.0, %v1352
    %v1354 = vsel %vm92, %v1347, %v1353
    %v1356 = vrot.slane %v1261, 6
    %v1358 = vmul.f32 %v1354, %v1356
    %1360 = vrot.lane.b32.xlu0 %v1354, 64
    %v1361 = vpop.permute.xlu0 %1360
    %v1363 = vmul.f32 %v1354, %v1361
    %1365 = vrot.lane.b32.xlu0 %v1363, 32
    %v1366 = vpop.permute.xlu0 %1365
    %v1368 = vadd.f32 %v1358, %v1366
    %v1369 = vtanh.pop %v1368
    %1371 = vrot.lane.b32.xlu0 %v1369, 64
    %v1372 = vpop.permute.xlu0 %1371
    %v1374 = vmul.f32 %v1354, %v1372
    %v1376 = vrot.slane %v1374, 2
    %1377 = vrot.lane.b32.xlu0 %v1376, 32
    %v1378 = vpop.permute.xlu0 %1377
    %v1379 = vsel %vm190, %v1378, 0
    %1381 = vmatprep.subr.mxu0 0.0
    %1382 = vmatpush1.msra.mxu0 0.0
    %1383 = vmatprep.subr.mxu0 0.0
    %1384 = vmatpush1.msra.mxu0 0.0
    %1385 = vmatprep.subr.mxu0 0.0
    %1386 = vmatpush1.msra.mxu0 0.0
    %1387 = vmatprep.subr.mxu0 0.0
    %1388 = vmatpush1.msra.mxu0 0.0
    %1389 = vmatprep.subr.mxu0 0.0
    %1390 = vmatpush1.msra.mxu0 0.0
    %1391 = vmatprep.subr.mxu0 0.0
    %1392 = vmatpush1.msra.mxu0 0.0
    %1393 = vmatprep.subr.mxu0 0.0
    %1394 = vmatpush1.msra.mxu0 0.0
    %1395 = vmatprep.subr.mxu0 0.0
    %1396 = vmatpush1.msra.mxu0 0.0
    %1397 = vmatprep.subr.mxu0 0.0
    %1398 = vmatpush1.msra.mxu0 0.0
    %1399 = vmatprep.subr.mxu0 0.0
    %1400 = vmatpush1.msra.mxu0 0.0
    %1401 = vmatprep.subr.mxu0 0.0
    %1402 = vmatpush1.msra.mxu0 0.0
    %1403 = vmatprep.subr.mxu0 0.0
    %1404 = vmatpush1.msra.mxu0 0.0
    %1405 = vmatprep.subr.mxu0 0.0
    %1406 = vmatpush1.msra.mxu0 %v1083
    %1407 = vmatprep.subr.mxu0 0.0
    %1408 = vmatpush1.msra.mxu0 %v1082
    %1409 = vmatprep.subr.mxu0 0.0
    %1410 = vmatpush1.msra.mxu0 %v1081
    %1411 = vmatprep.subr.mxu0 0.0
    %1412 = vmatpush1.msra.mxu0 %v1080
    %1413 = vmatprep.subr.mxu0 0.0
    %1414 = vmatpush2.msra.mxu0 0.0
    %1415 = vmatprep.subr.mxu0 0.0
    %1416 = vmatpush2.msra.mxu0 0.0
    %1417 = vmatprep.subr.mxu0 0.0
    %1418 = vmatpush2.msra.mxu0 0.0
    %1419 = vmatprep.subr.mxu0 0.0
    %1420 = vmatpush2.msra.mxu0 0.0
    %1421 = vmatprep.subr.mxu0 0.0
    %1422 = vmatpush2.msra.mxu0 0.0
    %1423 = vmatprep.subr.mxu0 0.0
    %1424 = vmatpush2.msra.mxu0 0.0
    %1425 = vmatprep.subr.mxu0 0.0
    %1426 = vmatpush2.msra.mxu0 0.0
    %1427 = vmatprep.subr.mxu0 0.0
    %1428 = vmatpush2.msra.mxu0 0.0
    %1429 = vmatprep.subr.mxu0 0.0
    %1430 = vmatpush2.msra.mxu0 0.0
    %1431 = vmatprep.subr.mxu0 0.0
    %1432 = vmatpush2.msra.mxu0 0.0
    %1433 = vmatprep.subr.mxu0 0.0
    %1434 = vmatpush2.msra.mxu0 0.0
    %1435 = vmatprep.subr.mxu0 0.0
    %1436 = vmatpush2.msra.mxu0 0.0
    %1437 = vmatprep.subr.mxu0 0.0
    %1438 = vmatpush2.msra.mxu0 0.0
    %1439 = vmatprep.subr.mxu0 0.0
    %1440 = vmatpush2.msra.mxu0 0.0
    %1441 = vmatprep.subr.mxu0 0.0
    %1442 = vmatpush2.msra.mxu0 0.0
    %1443 = vmatprep.subr.mxu0 0.0
    %1444 = vmatpush2.msra.mxu0 0.0
    %1445 = vmatprep.mubr.f32.mxu0 0.0
    %1446 = vmatmul.mubr.f32.gmra.mxu0 %v1379
    %v1447 = vpop.f32.mrf.mxu0
    %v1448 = vadd.f32 0.0, %v1447
    %v1449 = vpop.f32.mrf.mxu0
    %1450 = vdwg.mxu0
    %v1452 = vrot.slane %v1448, 4
    %v1454 = vadd.f32 %v1164, %v1452
    %v1455 = vtanh.pop %v1454
    %v1456 = vxor.u32 %v1454, 2147483648
    %v1457 = vmul.f32 %v1456, 1.442695
    %v1458 = vpow.pop %v1457
    %v1459 = vadd.f32 %v1458, 1.0
    %v1460 = vrcp.pop %v1459
    %v1461 = vmul.f32 1.0, %v1460
    %v1462 = vsel %vm92, %v1455, %v1461
    %v1464 = vrot.slane %v1368, 6
    %v1466 = vmul.f32 %v1462, %v1464
    %1468 = vrot.lane.b32.xlu0 %v1462, 64
    %v1469 = vpop.permute.xlu0 %1468
    %v1471 = vmul.f32 %v1462, %v1469
    %1473 = vrot.lane.b32.xlu0 %v1471, 32
    %v1474 = vpop.permute.xlu0 %1473
    %v1476 = vadd.f32 %v1466, %v1474
    %v1477 = vtanh.pop %v1476
    %1479 = vrot.lane.b32.xlu0 %v1477, 64
    %v1480 = vpop.permute.xlu0 %1479
    %v1482 = vmul.f32 %v1462, %v1480
    %v1484 = vrot.slane %v1482, 4
    %1485 = vrot.lane.b32.xlu0 %v1484, 32
    %v1486 = vpop.permute.xlu0 %1485
    %v1487 = vsel %vm190, %v1486, 0
    %1489 = vmatprep.subr.mxu0 0.0
    %1490 = vmatpush1.msra.mxu0 0.0
    %1491 = vmatprep.subr.mxu0 0.0
    %1492 = vmatpush1.msra.mxu0 0.0
    %1493 = vmatprep.subr.mxu0 0.0
    %1494 = vmatpush1.msra.mxu0 0.0
    %1495 = vmatprep.subr.mxu0 0.0
    %1496 = vmatpush1.msra.mxu0 0.0
    %1497 = vmatprep.subr.mxu0 0.0
    %1498 = vmatpush1.msra.mxu0 0.0
    %1499 = vmatprep.subr.mxu0 0.0
    %1500 = vmatpush1.msra.mxu0 0.0
    %1501 = vmatprep.subr.mxu0 0.0
    %1502 = vmatpush1.msra.mxu0 0.0
    %1503 = vmatprep.subr.mxu0 0.0
    %1504 = vmatpush1.msra.mxu0 0.0
    %1505 = vmatprep.subr.mxu0 0.0
    %1506 = vmatpush1.msra.mxu0 0.0
    %1507 = vmatprep.subr.mxu0 0.0
    %1508 = vmatpush1.msra.mxu0 0.0
    %1509 = vmatprep.subr.mxu0 0.0
    %1510 = vmatpush1.msra.mxu0 0.0
    %1511 = vmatprep.subr.mxu0 0.0
    %1512 = vmatpush1.msra.mxu0 0.0
    %1513 = vmatprep.subr.mxu0 0.0
    %1514 = vmatpush1.msra.mxu0 %v1083
    %1515 = vmatprep.subr.mxu0 0.0
    %1516 = vmatpush1.msra.mxu0 %v1082
    %1517 = vmatprep.subr.mxu0 0.0
    %1518 = vmatpush1.msra.mxu0 %v1081
    %1519 = vmatprep.subr.mxu0 0.0
    %1520 = vmatpush1.msra.mxu0 %v1080
    %1521 = vmatprep.subr.mxu0 0.0
    %1522 = vmatpush2.msra.mxu0 0.0
    %1523 = vmatprep.subr.mxu0 0.0
    %1524 = vmatpush2.msra.mxu0 0.0
    %1525 = vmatprep.subr.mxu0 0.0
    %1526 = vmatpush2.msra.mxu0 0.0
    %1527 = vmatprep.subr.mxu0 0.0
    %1528 = vmatpush2.msra.mxu0 0.0
    %1529 = vmatprep.subr.mxu0 0.0
    %1530 = vmatpush2.msra.mxu0 0.0
    %1531 = vmatprep.subr.mxu0 0.0
    %1532 = vmatpush2.msra.mxu0 0.0
    %1533 = vmatprep.subr.mxu0 0.0
    %1534 = vmatpush2.msra.mxu0 0.0
    %1535 = vmatprep.subr.mxu0 0.0
    %1536 = vmatpush2.msra.mxu0 0.0
    %1537 = vmatprep.subr.mxu0 0.0
    %1538 = vmatpush2.msra.mxu0 0.0
    %1539 = vmatprep.subr.mxu0 0.0
    %1540 = vmatpush2.msra.mxu0 0.0
    %1541 = vmatprep.subr.mxu0 0.0
    %1542 = vmatpush2.msra.mxu0 0.0
    %1543 = vmatprep.subr.mxu0 0.0
    %1544 = vmatpush2.msra.mxu0 0.0
    %1545 = vmatprep.subr.mxu0 0.0
    %1546 = vmatpush2.msra.mxu0 0.0
    %1547 = vmatprep.subr.mxu0 0.0
    %1548 = vmatpush2.msra.mxu0 0.0
    %1549 = vmatprep.subr.mxu0 0.0
    %1550 = vmatpush2.msra.mxu0 0.0
    %1551 = vmatprep.subr.mxu0 0.0
    %1552 = vmatpush2.msra.mxu0 0.0
    %1553 = vmatprep.mubr.f32.mxu0 0.0
    %1554 = vmatmul.mubr.f32.gmra.mxu0 %v1487
    %v1555 = vpop.f32.mrf.mxu0
    %v1556 = vadd.f32 0.0, %v1555
    %v1557 = vpop.f32.mrf.mxu0
    %1558 = vdwg.mxu0
    %v1560 = vrot.slane %v1556, 2
    %v1562 = vadd.f32 %v1164, %v1560
    %v1563 = vtanh.pop %v1562
    %v1564 = vxor.u32 %v1562, 2147483648
    %v1565 = vmul.f32 %v1564, 1.442695
    %v1566 = vpow.pop %v1565
    %v1567 = vadd.f32 %v1566, 1.0
    %v1568 = vrcp.pop %v1567
    %v1569 = vmul.f32 1.0, %v1568
    %v1570 = vsel %vm92, %v1563, %v1569
    %v1572 = vrot.slane %v1476, 6
    %v1574 = vmul.f32 %v1570, %v1572
    %1576 = vrot.lane.b32.xlu0 %v1570, 64
    %v1577 = vpop.permute.xlu0 %1576
    %v1579 = vmul.f32 %v1570, %v1577
    %1581 = vrot.lane.b32.xlu0 %v1579, 32
    %v1582 = vpop.permute.xlu0 %1581
    %v1584 = vadd.f32 %v1574, %v1582
    %v1585 = vtanh.pop %v1584
    %1587 = vrot.lane.b32.xlu0 %v1585, 64
    %v1588 = vpop.permute.xlu0 %1587
    %v1590 = vmul.f32 %v1570, %v1588
    %v1592 = vrot.slane %v1590, 6
    %1593 = vrot.lane.b32.xlu0 %v1592, 32
    %v1594 = vpop.permute.xlu0 %1593
    %v1595 = vsel %vm190, %v1594, 0
    %1597 = vmatprep.subr.mxu0 0.0
    %1598 = vmatpush1.msra.mxu0 0.0
    %1599 = vmatprep.subr.mxu0 0.0
    %1600 = vmatpush1.msra.mxu0 0.0
    %1601 = vmatprep.subr.mxu0 0.0
    %1602 = vmatpush1.msra.mxu0 0.0
    %1603 = vmatprep.subr.mxu0 0.0
    %1604 = vmatpush1.msra.mxu0 0.0
    %1605 = vmatprep.subr.mxu0 0.0
    %1606 = vmatpush1.msra.mxu0 0.0
    %1607 = vmatprep.subr.mxu0 0.0
    %1608 = vmatpush1.msra.mxu0 0.0
    %1609 = vmatprep.subr.mxu0 0.0
    %1610 = vmatpush1.msra.mxu0 0.0
    %1611 = vmatprep.subr.mxu0 0.0
    %1612 = vmatpush1.msra.mxu0 0.0
    %1613 = vmatprep.subr.mxu0 0.0
    %1614 = vmatpush1.msra.mxu0 0.0
    %1615 = vmatprep.subr.mxu0 0.0
    %1616 = vmatpush1.msra.mxu0 0.0
    %1617 = vmatprep.subr.mxu0 0.0
    %1618 = vmatpush1.msra.mxu0 0.0
    %1619 = vmatprep.subr.mxu0 0.0
    %1620 = vmatpush1.msra.mxu0 0.0
    %1621 = vmatprep.subr.mxu0 0.0
    %1622 = vmatpush1.msra.mxu0 %v1083
    %1623 = vmatprep.subr.mxu0 0.0
    %1624 = vmatpush1.msra.mxu0 %v1082
    %1625 = vmatprep.subr.mxu0 0.0
    %1626 = vmatpush1.msra.mxu0 %v1081
    %1627 = vmatprep.subr.mxu0 0.0
    %1628 = vmatpush1.msra.mxu0 %v1080
    %1629 = vmatprep.subr.mxu0 0.0
    %1630 = vmatpush2.msra.mxu0 0.0
    %1631 = vmatprep.subr.mxu0 0.0
    %1632 = vmatpush2.msra.mxu0 0.0
    %1633 = vmatprep.subr.mxu0 0.0
    %1634 = vmatpush2.msra.mxu0 0.0
    %1635 = vmatprep.subr.mxu0 0.0
    %1636 = vmatpush2.msra.mxu0 0.0
    %1637 = vmatprep.subr.mxu0 0.0
    %1638 = vmatpush2.msra.mxu0 0.0
    %1639 = vmatprep.subr.mxu0 0.0
    %1640 = vmatpush2.msra.mxu0 0.0
    %1641 = vmatprep.subr.mxu0 0.0
    %1642 = vmatpush2.msra.mxu0 0.0
    %1643 = vmatprep.subr.mxu0 0.0
    %1644 = vmatpush2.msra.mxu0 0.0
    %1645 = vmatprep.subr.mxu0 0.0
    %1646 = vmatpush2.msra.mxu0 0.0
    %1647 = vmatprep.subr.mxu0 0.0
    %1648 = vmatpush2.msra.mxu0 0.0
    %1649 = vmatprep.subr.mxu0 0.0
    %1650 = vmatpush2.msra.mxu0 0.0
    %1651 = vmatprep.subr.mxu0 0.0
    %1652 = vmatpush2.msra.mxu0 0.0
    %1653 = vmatprep.subr.mxu0 0.0
    %1654 = vmatpush2.msra.mxu0 0.0
    %1655 = vmatprep.subr.mxu0 0.0
    %1656 = vmatpush2.msra.mxu0 0.0
    %1657 = vmatprep.subr.mxu0 0.0
    %1658 = vmatpush2.msra.mxu0 0.0
    %1659 = vmatprep.subr.mxu0 0.0
    %1660 = vmatpush2.msra.mxu0 0.0
    %1661 = vmatprep.mubr.f32.mxu0 0.0
    %1662 = vmatmul.mubr.f32.gmra.mxu0 %v1595
    %v1663 = vpop.f32.mrf.mxu0
    %v1664 = vadd.f32 0.0, %v1663
    %v1665 = vpop.f32.mrf.mxu0
    %1666 = vdwg.mxu0
    %v1667 = vadd.f32 %v1169, %v1664
    %v1668 = vtanh.pop %v1667
    %v1669 = vxor.u32 %v1667, 2147483648
    %v1670 = vmul.f32 %v1669, 1.442695
    %v1671 = vpow.pop %v1670
    %v1672 = vadd.f32 %v1671, 1.0
    %v1673 = vrcp.pop %v1672
    %v1674 = vmul.f32 1.0, %v1673
    %v1675 = vsel %vm92, %v1668, %v1674
    %v1677 = vrot.slane %v1584, 6
    %v1679 = vmul.f32 %v1675, %v1677
    %1681 = vrot.lane.b32.xlu0 %v1675, 64
    %v1682 = vpop.permute.xlu0 %1681
    %v1684 = vmul.f32 %v1675, %v1682
    %1686 = vrot.lane.b32.xlu0 %v1684, 32
    %v1687 = vpop.permute.xlu0 %1686
    %v1689 = vadd.f32 %v1679, %v1687
    %v1690 = vtanh.pop %v1689
    %1692 = vrot.lane.b32.xlu0 %v1690, 64
    %v1693 = vpop.permute.xlu0 %1692
    %v1695 = vmul.f32 %v1675, %v1693
    %1697 = vrot.lane.b32.xlu0 %v1695, 32
    %v1698 = vpop.permute.xlu0 %1697
    %v1699 = vsel %vm190, %v1698, 0
    %1701 = vmatprep.subr.mxu0 0.0
    %1702 = vmatpush1.msra.mxu0 0.0
    %1703 = vmatprep.subr.mxu0 0.0
    %1704 = vmatpush1.msra.mxu0 0.0
    %1705 = vmatprep.subr.mxu0 0.0
    %1706 = vmatpush1.msra.mxu0 0.0
    %1707 = vmatprep.subr.mxu0 0.0
    %1708 = vmatpush1.msra.mxu0 0.0
    %1709 = vmatprep.subr.mxu0 0.0
    %1710 = vmatpush1.msra.mxu0 0.0
    %1711 = vmatprep.subr.mxu0 0.0
    %1712 = vmatpush1.msra.mxu0 0.0
    %1713 = vmatprep.subr.mxu0 0.0
    %1714 = vmatpush1.msra.mxu0 0.0
    %1715 = vmatprep.subr.mxu0 0.0
    %1716 = vmatpush1.msra.mxu0 0.0
    %1717 = vmatprep.subr.mxu0 0.0
    %1718 = vmatpush1.msra.mxu0 0.0
    %1719 = vmatprep.subr.mxu0 0.0
    %1720 = vmatpush1.msra.mxu0 0.0
    %1721 = vmatprep.subr.mxu0 0.0
    %1722 = vmatpush1.msra.mxu0 0.0
    %1723 = vmatprep.subr.mxu0 0.0
    %1724 = vmatpush1.msra.mxu0 0.0
    %1725 = vmatprep.subr.mxu0 0.0
    %1726 = vmatpush1.msra.mxu0 %v1083
    %1727 = vmatprep.subr.mxu0 0.0
    %1728 = vmatpush1.msra.mxu0 %v1082
    %1729 = vmatprep.subr.mxu0 0.0
    %1730 = vmatpush1.msra.mxu0 %v1081
    %1731 = vmatprep.subr.mxu0 0.0
    %1732 = vmatpush1.msra.mxu0 %v1080
    %1733 = vmatprep.subr.mxu0 0.0
    %1734 = vmatpush2.msra.mxu0 0.0
    %1735 = vmatprep.subr.mxu0 0.0
    %1736 = vmatpush2.msra.mxu0 0.0
    %1737 = vmatprep.subr.mxu0 0.0
    %1738 = vmatpush2.msra.mxu0 0.0
    %1739 = vmatprep.subr.mxu0 0.0
    %1740 = vmatpush2.msra.mxu0 0.0
    %1741 = vmatprep.subr.mxu0 0.0
    %1742 = vmatpush2.msra.mxu0 0.0
    %1743 = vmatprep.subr.mxu0 0.0
    %1744 = vmatpush2.msra.mxu0 0.0
    %1745 = vmatprep.subr.mxu0 0.0
    %1746 = vmatpush2.msra.mxu0 0.0
    %1747 = vmatprep.subr.mxu0 0.0
    %1748 = vmatpush2.msra.mxu0 0.0
    %1749 = vmatprep.subr.mxu0 0.0
    %1750 = vmatpush2.msra.mxu0 0.0
    %1751 = vmatprep.subr.mxu0 0.0
    %1752 = vmatpush2.msra.mxu0 0.0
    %1753 = vmatprep.subr.mxu0 0.0
    %1754 = vmatpush2.msra.mxu0 0.0
    %1755 = vmatprep.subr.mxu0 0.0
    %1756 = vmatpush2.msra.mxu0 0.0
    %1757 = vmatprep.subr.mxu0 0.0
    %1758 = vmatpush2.msra.mxu0 0.0
    %1759 = vmatprep.subr.mxu0 0.0
    %1760 = vmatpush2.msra.mxu0 0.0
    %1761 = vmatprep.subr.mxu0 0.0
    %1762 = vmatpush2.msra.mxu0 0.0
    %1763 = vmatprep.subr.mxu0 0.0
    %1764 = vmatpush2.msra.mxu0 0.0
    %1765 = vmatprep.mubr.f32.mxu0 0.0
    %1766 = vmatmul.mubr.f32.gmra.mxu0 %v1699
    %v1767 = vpop.f32.mrf.mxu0
    %v1768 = vadd.f32 0.0, %v1767
    %v1769 = vpop.f32.mrf.mxu0
    %1770 = vdwg.mxu0
    %v1772 = vrot.slane %v1768, 6
    %v1774 = vadd.f32 %v1169, %v1772
    %v1775 = vtanh.pop %v1774
    %v1776 = vxor.u32 %v1774, 2147483648
    %v1777 = vmul.f32 %v1776, 1.442695
    %v1778 = vpow.pop %v1777
    %v1779 = vadd.f32 %v1778, 1.0
    %v1780 = vrcp.pop %v1779
    %v1781 = vmul.f32 1.0, %v1780
    %v1782 = vsel %vm92, %v1775, %v1781
    %v1784 = vrot.slane %v1689, 6
    %v1786 = vmul.f32 %v1782, %v1784
    %1788 = vrot.lane.b32.xlu0 %v1782, 64
    %v1789 = vpop.permute.xlu0 %1788
    %v1791 = vmul.f32 %v1782, %v1789
    %1793 = vrot.lane.b32.xlu0 %v1791, 32
    %v1794 = vpop.permute.xlu0 %1793
    %v1796 = vadd.f32 %v1786, %v1794
    %v1797 = vtanh.pop %v1796
    %1799 = vrot.lane.b32.xlu0 %v1797, 64
    %v1800 = vpop.permute.xlu0 %1799
    %v1802 = vmul.f32 %v1782, %v1800
    %v1804 = vrot.slane %v1802, 2
    %1805 = vrot.lane.b32.xlu0 %v1804, 32
    %v1806 = vpop.permute.xlu0 %1805
    %v1807 = vsel %vm190, %v1806, 0
    %1809 = vmatprep.subr.mxu0 0.0
    %1810 = vmatpush1.msra.mxu0 0.0
    %1811 = vmatprep.subr.mxu0 0.0
    %1812 = vmatpush1.msra.mxu0 0.0
    %1813 = vmatprep.subr.mxu0 0.0
    %1814 = vmatpush1.msra.mxu0 0.0
    %1815 = vmatprep.subr.mxu0 0.0
    %1816 = vmatpush1.msra.mxu0 0.0
    %1817 = vmatprep.subr.mxu0 0.0
    %1818 = vmatpush1.msra.mxu0 0.0
    %1819 = vmatprep.subr.mxu0 0.0
    %1820 = vmatpush1.msra.mxu0 0.0
    %1821 = vmatprep.subr.mxu0 0.0
    %1822 = vmatpush1.msra.mxu0 0.0
    %1823 = vmatprep.subr.mxu0 0.0
    %1824 = vmatpush1.msra.mxu0 0.0
    %1825 = vmatprep.subr.mxu0 0.0
    %1826 = vmatpush1.msra.mxu0 0.0
    %1827 = vmatprep.subr.mxu0 0.0
    %1828 = vmatpush1.msra.mxu0 0.0
    %1829 = vmatprep.subr.mxu0 0.0
    %1830 = vmatpush1.msra.mxu0 0.0
    %1831 = vmatprep.subr.mxu0 0.0
    %1832 = vmatpush1.msra.mxu0 0.0
    %1833 = vmatprep.subr.mxu0 0.0
    %1834 = vmatpush1.msra.mxu0 %v1083
    %1835 = vmatprep.subr.mxu0 0.0
    %1836 = vmatpush1.msra.mxu0 %v1082
    %1837 = vmatprep.subr.mxu0 0.0
    %1838 = vmatpush1.msra.mxu0 %v1081
    %1839 = vmatprep.subr.mxu0 0.0
    %1840 = vmatpush1.msra.mxu0 %v1080
    %1841 = vmatprep.subr.mxu0 0.0
    %1842 = vmatpush2.msra.mxu0 0.0
    %1843 = vmatprep.subr.mxu0 0.0
    %1844 = vmatpush2.msra.mxu0 0.0
    %1845 = vmatprep.subr.mxu0 0.0
    %1846 = vmatpush2.msra.mxu0 0.0
    %1847 = vmatprep.subr.mxu0 0.0
    %1848 = vmatpush2.msra.mxu0 0.0
    %1849 = vmatprep.subr.mxu0 0.0
    %1850 = vmatpush2.msra.mxu0 0.0
    %1851 = vmatprep.subr.mxu0 0.0
    %1852 = vmatpush2.msra.mxu0 0.0
    %1853 = vmatprep.subr.mxu0 0.0
    %1854 = vmatpush2.msra.mxu0 0.0
    %1855 = vmatprep.subr.mxu0 0.0
    %1856 = vmatpush2.msra.mxu0 0.0
    %1857 = vmatprep.subr.mxu0 0.0
    %1858 = vmatpush2.msra.mxu0 0.0
    %1859 = vmatprep.subr.mxu0 0.0
    %1860 = vmatpush2.msra.mxu0 0.0
    %1861 = vmatprep.subr.mxu0 0.0
    %1862 = vmatpush2.msra.mxu0 0.0
    %1863 = vmatprep.subr.mxu0 0.0
    %1864 = vmatpush2.msra.mxu0 0.0
    %1865 = vmatprep.subr.mxu0 0.0
    %1866 = vmatpush2.msra.mxu0 0.0
    %1867 = vmatprep.subr.mxu0 0.0
    %1868 = vmatpush2.msra.mxu0 0.0
    %1869 = vmatprep.subr.mxu0 0.0
    %1870 = vmatpush2.msra.mxu0 0.0
    %1871 = vmatprep.subr.mxu0 0.0
    %1872 = vmatpush2.msra.mxu0 0.0
    %1873 = vmatprep.mubr.f32.mxu0 0.0
    %1874 = vmatmul.mubr.f32.gmra.mxu0 %v1807
    %v1875 = vpop.f32.mrf.mxu0
    %v1876 = vadd.f32 0.0, %v1875
    %v1877 = vpop.f32.mrf.mxu0
    %1878 = vdwg.mxu0
    %v1880 = vrot.slane %v1876, 4
    %v1882 = vadd.f32 %v1169, %v1880
    %v1883 = vtanh.pop %v1882
    %v1884 = vxor.u32 %v1882, 2147483648
    %v1885 = vmul.f32 %v1884, 1.442695
    %v1886 = vpow.pop %v1885
    %v1887 = vadd.f32 %v1886, 1.0
    %v1888 = vrcp.pop %v1887
    %v1889 = vmul.f32 1.0, %v1888
    %v1890 = vsel %vm92, %v1883, %v1889
    %v1892 = vrot.slane %v1796, 6
    %v1894 = vmul.f32 %v1890, %v1892
    %1896 = vrot.lane.b32.xlu0 %v1890, 64
    %v1897 = vpop.permute.xlu0 %1896
    %v1899 = vmul.f32 %v1890, %v1897
    %1901 = vrot.lane.b32.xlu0 %v1899, 32
    %v1902 = vpop.permute.xlu0 %1901
    %v1904 = vadd.f32 %v1894, %v1902
    %v1905 = vtanh.pop %v1904
    %1907 = vrot.lane.b32.xlu0 %v1905, 64
    %v1908 = vpop.permute.xlu0 %1907
    %v1910 = vmul.f32 %v1890, %v1908
    %v1912 = vrot.slane %v1910, 4
    %1913 = vrot.lane.b32.xlu0 %v1912, 32
    %v1914 = vpop.permute.xlu0 %1913
    %v1915 = vsel %vm190, %v1914, 0
    %1917 = vmatprep.subr.mxu0 0.0
    %1918 = vmatpush1.msra.mxu0 0.0
    %1919 = vmatprep.subr.mxu0 0.0
    %1920 = vmatpush1.msra.mxu0 0.0
    %1921 = vmatprep.subr.mxu0 0.0
    %1922 = vmatpush1.msra.mxu0 0.0
    %1923 = vmatprep.subr.mxu0 0.0
    %1924 = vmatpush1.msra.mxu0 0.0
    %1925 = vmatprep.subr.mxu0 0.0
    %1926 = vmatpush1.msra.mxu0 0.0
    %1927 = vmatprep.subr.mxu0 0.0
    %1928 = vmatpush1.msra.mxu0 0.0
    %1929 = vmatprep.subr.mxu0 0.0
    %1930 = vmatpush1.msra.mxu0 0.0
    %1931 = vmatprep.subr.mxu0 0.0
    %1932 = vmatpush1.msra.mxu0 0.0
    %1933 = vmatprep.subr.mxu0 0.0
    %1934 = vmatpush1.msra.mxu0 0.0
    %1935 = vmatprep.subr.mxu0 0.0
    %1936 = vmatpush1.msra.mxu0 0.0
    %1937 = vmatprep.subr.mxu0 0.0
    %1938 = vmatpush1.msra.mxu0 0.0
    %1939 = vmatprep.subr.mxu0 0.0
    %1940 = vmatpush1.msra.mxu0 0.0
    %1941 = vmatprep.subr.mxu0 0.0
    %1942 = vmatpush1.msra.mxu0 %v1083
    %1943 = vmatprep.subr.mxu0 0.0
    %1944 = vmatpush1.msra.mxu0 %v1082
    %1945 = vmatprep.subr.mxu0 0.0
    %1946 = vmatpush1.msra.mxu0 %v1081
    %1947 = vmatprep.subr.mxu0 0.0
    %1948 = vmatpush1.msra.mxu0 %v1080
    %1949 = vmatprep.subr.mxu0 0.0
    %1950 = vmatpush2.msra.mxu0 0.0
    %1951 = vmatprep.subr.mxu0 0.0
    %1952 = vmatpush2.msra.mxu0 0.0
    %1953 = vmatprep.subr.mxu0 0.0
    %1954 = vmatpush2.msra.mxu0 0.0
    %1955 = vmatprep.subr.mxu0 0.0
    %1956 = vmatpush2.msra.mxu0 0.0
    %1957 = vmatprep.subr.mxu0 0.0
    %1958 = vmatpush2.msra.mxu0 0.0
    %1959 = vmatprep.subr.mxu0 0.0
    %1960 = vmatpush2.msra.mxu0 0.0
    %1961 = vmatprep.subr.mxu0 0.0
    %1962 = vmatpush2.msra.mxu0 0.0
    %1963 = vmatprep.subr.mxu0 0.0
    %1964 = vmatpush2.msra.mxu0 0.0
    %1965 = vmatprep.subr.mxu0 0.0
    %1966 = vmatpush2.msra.mxu0 0.0
    %1967 = vmatprep.subr.mxu0 0.0
    %1968 = vmatpush2.msra.mxu0 0.0
    %1969 = vmatprep.subr.mxu0 0.0
    %1970 = vmatpush2.msra.mxu0 0.0
    %1971 = vmatprep.subr.mxu0 0.0
    %1972 = vmatpush2.msra.mxu0 0.0
    %1973 = vmatprep.subr.mxu0 0.0
    %1974 = vmatpush2.msra.mxu0 0.0
    %1975 = vmatprep.subr.mxu0 0.0
    %1976 = vmatpush2.msra.mxu0 0.0
    %1977 = vmatprep.subr.mxu0 0.0
    %1978 = vmatpush2.msra.mxu0 0.0
    %1979 = vmatprep.subr.mxu0 0.0
    %1980 = vmatpush2.msra.mxu0 0.0
    %1981 = vmatprep.mubr.f32.mxu0 0.0
    %1982 = vmatmul.mubr.f32.gmra.mxu0 %v1915
    %v1983 = vpop.f32.mrf.mxu0
    %v1984 = vadd.f32 0.0, %v1983
    %v1985 = vpop.f32.mrf.mxu0
    %1986 = vdwg.mxu0
    %v1988 = vrot.slane %v1984, 2
    %v1990 = vadd.f32 %v1169, %v1988
    %v1991 = vtanh.pop %v1990
    %v1992 = vxor.u32 %v1990, 2147483648
    %v1993 = vmul.f32 %v1992, 1.442695
    %v1994 = vpow.pop %v1993
    %v1995 = vadd.f32 %v1994, 1.0
    %v1996 = vrcp.pop %v1995
    %v1997 = vmul.f32 1.0, %v1996
    %v1998 = vsel %vm92, %v1991, %v1997
    %v2000 = vrot.slane %v1904, 6
    %v2002 = vmul.f32 %v1998, %v2000
    %2004 = vrot.lane.b32.xlu0 %v1998, 64
    %v2005 = vpop.permute.xlu0 %2004
    %v2007 = vmul.f32 %v1998, %v2005
    %2009 = vrot.lane.b32.xlu0 %v2007, 32
    %v2010 = vpop.permute.xlu0 %2009
    %v2012 = vadd.f32 %v2002, %v2010
    %v2013 = vtanh.pop %v2012
    %2015 = vrot.lane.b32.xlu0 %v2013, 64
    %v2016 = vpop.permute.xlu0 %2015
    %v2018 = vmul.f32 %v1998, %v2016
    %v2019 = vld [vmem:[%s7] sm:$0xff]
    %v2020 = vld [vmem:[%s7 + $0x8] sm:$0xff]
    %v2021 = vld [vmem:[%s7 + $0x10] sm:$0xff]
    %v2022 = vld [vmem:[%s7 + $0x18] sm:$0xff]
    %v2023 = vld [vmem:[%s8] sm:$0x1]
    %v2025 = vlaneseq
    %v2026 = vshrl.u32 %v2025, 7
    %v2027 = vsub.s32 0, %v2026
    %v2028 = vrot.slane %v2023, %v2027
    %v2031 = vrot.slane %v2018, 6
    %2032 = vrot.lane.b32.xlu0 %v2031, 32
    %v2033 = vpop.permute.xlu0 %2032
    %v2034 = vsel %vm190, %v2033, 0
    %2036 = vmatprep.subr.mxu0 0.0
    %2037 = vmatpush1.msra.mxu0 0.0
    %2038 = vmatprep.subr.mxu0 0.0
    %2039 = vmatpush1.msra.mxu0 0.0
    %2040 = vmatprep.subr.mxu0 0.0
    %2041 = vmatpush1.msra.mxu0 0.0
    %2042 = vmatprep.subr.mxu0 0.0
    %2043 = vmatpush1.msra.mxu0 0.0
    %2044 = vmatprep.subr.mxu0 0.0
    %2045 = vmatpush1.msra.mxu0 0.0
    %2046 = vmatprep.subr.mxu0 0.0
    %2047 = vmatpush1.msra.mxu0 0.0
    %2048 = vmatprep.subr.mxu0 0.0
    %2049 = vmatpush1.msra.mxu0 0.0
    %2050 = vmatprep.subr.mxu0 0.0
    %2051 = vmatpush1.msra.mxu0 0.0
    %2052 = vmatprep.subr.mxu0 0.0
    %2053 = vmatpush1.msra.mxu0 0.0
    %2054 = vmatprep.subr.mxu0 0.0
    %2055 = vmatpush1.msra.mxu0 0.0
    %2056 = vmatprep.subr.mxu0 0.0
    %2057 = vmatpush1.msra.mxu0 0.0
    %2058 = vmatprep.subr.mxu0 0.0
    %2059 = vmatpush1.msra.mxu0 0.0
    %2060 = vmatprep.subr.mxu0 0.0
    %2061 = vmatpush1.msra.mxu0 %v2022
    %2062 = vmatprep.subr.mxu0 0.0
    %2063 = vmatpush1.msra.mxu0 %v2021
    %2064 = vmatprep.subr.mxu0 0.0
    %2065 = vmatpush1.msra.mxu0 %v2020
    %2066 = vmatprep.subr.mxu0 0.0
    %2067 = vmatpush1.msra.mxu0 %v2019
    %2068 = vmatprep.subr.mxu0 0.0
    %2069 = vmatpush2.msra.mxu0 0.0
    %2070 = vmatprep.subr.mxu0 0.0
    %2071 = vmatpush2.msra.mxu0 0.0
    %2072 = vmatprep.subr.mxu0 0.0
    %2073 = vmatpush2.msra.mxu0 0.0
    %2074 = vmatprep.subr.mxu0 0.0
    %2075 = vmatpush2.msra.mxu0 0.0
    %2076 = vmatprep.subr.mxu0 0.0
    %2077 = vmatpush2.msra.mxu0 0.0
    %2078 = vmatprep.subr.mxu0 0.0
    %2079 = vmatpush2.msra.mxu0 0.0
    %2080 = vmatprep.subr.mxu0 0.0
    %2081 = vmatpush2.msra.mxu0 0.0
    %2082 = vmatprep.subr.mxu0 0.0
    %2083 = vmatpush2.msra.mxu0 0.0
    %2084 = vmatprep.subr.mxu0 0.0
    %2085 = vmatpush2.msra.mxu0 0.0
    %2086 = vmatprep.subr.mxu0 0.0
    %2087 = vmatpush2.msra.mxu0 0.0
    %2088 = vmatprep.subr.mxu0 0.0
    %2089 = vmatpush2.msra.mxu0 0.0
    %2090 = vmatprep.subr.mxu0 0.0
    %2091 = vmatpush2.msra.mxu0 0.0
    %2092 = vmatprep.subr.mxu0 0.0
    %2093 = vmatpush2.msra.mxu0 0.0
    %2094 = vmatprep.subr.mxu0 0.0
    %2095 = vmatpush2.msra.mxu0 0.0
    %2096 = vmatprep.subr.mxu0 0.0
    %2097 = vmatpush2.msra.mxu0 0.0
    %2098 = vmatprep.subr.mxu0 0.0
    %2099 = vmatpush2.msra.mxu0 0.0
    %2100 = vmatprep.mubr.f32.mxu0 0.0
    %2101 = vmatmul.mubr.f32.gmra.mxu0 %v2034
    %v2102 = vpop.f32.mrf.mxu0
    %v2103 = vadd.f32 %v2028, %v2102
    %v2104 = vpop.f32.mrf.mxu0
    %2105 = vdwg.mxu0
    %vm2106 = vcmask 25600
    %2107 = vst.msk [vmem:[#allocation11] sm:$0x3] %vm2106, %v2103
    // Predicated region
    $region54: #{tpu_custom_call.1} parent=1 // pred_check
      _
    $region55: #{tpu_custom_call.1} parent=1 // pred_check_branch
      %2109 = sbr.rel (0) target = $region57
    $region56: #{tpu_custom_call.1} parent=1 // pred_region
      %s2111 = ssub.s32 32, 32
      %2112 = vsyncadd [#allocation5], %s2111
      %s2114 = sshll.u32 [#allocation11], 4
      %s2115 = int_to_ptr.vmem [resolvable:$true] %s2114
      %2117 = dma.vmem_to_hbm [thread:$0]  %s2115, 32, %s9, [#allocation5]
    $region57: #{tpu_custom_call.1} parent=1 // pred_fallthru
      _
    // Predicated region
    $region58: #{tpu_custom_call.1} parent=1 // pred_check
      _
    $region59: #{tpu_custom_call.1} parent=1 // pred_check_branch
      %2119 = sbr.rel (0) target = $region61
    $region60: #{tpu_custom_call.1} parent=1 // pred_region
      %2120 = dma.done [#allocation5], 32
    $region61: #{tpu_custom_call.1} parent=1 // pred_fallthru
      _
    %2121 = vsyncpa [#allocation4], 1
    %2122 = vsyncpa [#allocation7], 1
    %2123 = vsyncpa [#allocation10], 1
    %2124 = vsyncpa [#allocation5], 1

</llo_original>
